<compile_context>
chip_gen: v6e
topology: v6e:2x2x1
jax: 0.10.0
libtpu: 0.0.40
codegen_flags: <defaults>
</compile_context>

<pallas_src>
import numpy as np
import jax
import jax.numpy as jnp
from jax import lax
from jax.experimental import pallas as pl
from jax.experimental.pallas import tpu as pltpu


def _round_up(n, m):
    return ((n + m - 1) // m) * m


# ---------------------------------------------------------------------------
# Kernel: one batch tile, all weights VMEM-resident (constant index_map)
# ---------------------------------------------------------------------------
def vae_forward_kernel(x_ref, eps_ref,
                       w_e1_ref, b_e1_ref,
                       w_e2_ref, b_e2_ref,
                       w_e3_ref, b_e3_ref,
                       w_d4_ref, b_d4_ref,
                       w_d5_ref, b_d5_ref,
                       out_ref, mean_ref, logvar_ref):
    hi = lax.Precision.HIGHEST
    x = x_ref[...]

    # --- encoder ---
    h = jnp.dot(x, w_e1_ref[...], precision=hi,
                preferred_element_type=jnp.float32) + b_e1_ref[...]
    h = jnp.maximum(h, 0.0)

    mean = jnp.dot(h, w_e2_ref[...], precision=hi,
                   preferred_element_type=jnp.float32) + b_e2_ref[...]
    log_var = jnp.dot(h, w_e3_ref[...], precision=hi,
                      preferred_element_type=jnp.float32) + b_e3_ref[...]

    # --- reparameterize: std = exp(log_var)^0.5 = exp(0.5*log_var) ---
    z = mean + jnp.exp(0.5 * log_var) * eps_ref[...]

    # --- decoder_vec ---
    d = jnp.dot(z, w_d4_ref[...], precision=hi,
                preferred_element_type=jnp.float32) + b_d4_ref[...]
    d = jnp.maximum(d, 0.0)
    out = jnp.dot(d, w_d5_ref[...], precision=hi,
                  preferred_element_type=jnp.float32) + b_d5_ref[...]

    out_ref[...] = out
    mean_ref[...] = mean
    logvar_ref[...] = log_var


# ---------------------------------------------------------------------------
# Batch-tile selection:
#   * multiple of 8 sublanes (unless N itself is < 8, then one full-dim block)
#   * capped at tm_max (default 1024)
#   * forced to give >= 2 grid steps when N > 8 so v7x's 2 TensorCores both work
# ---------------------------------------------------------------------------
def _pick_tm(n, tm_max):
    if n <= 8:
        return n                      # single block equal to the full batch dim
    tm = min(tm_max, _round_up(n, 8))
    if pl.cdiv(n, tm) < 2:            # would leave a v7x TensorCore idle
        tm = max(8, _round_up(pl.cdiv(n, 2), 8))
    return tm


# ---------------------------------------------------------------------------
# Wrapper: raw shapes in / raw shapes out, no HBM pad or slice passes
# ---------------------------------------------------------------------------
def vae_forward(x, eps, p, *, tm=1024):
    n, para_dim = x.shape
    z_dim = eps.shape[1]
    h_dim = p["w_e1"].shape[1]

    TM = _pick_tm(n, tm)
    grid = (pl.cdiv(n, TM),)          # partial last block handled by Pallas masking

    def act(cols):                    # batch-tiled activation (full last dim)
        return pl.BlockSpec((TM, cols), lambda i: (i, 0))

    def resident(shape):              # weight/bias: constant block -> stays in VMEM
        return pl.BlockSpec(shape, lambda i: (0, 0))

    in_specs = [
        act(para_dim), act(z_dim),
        resident((para_dim, h_dim)), resident((1, h_dim)),   # e1
        resident((h_dim, z_dim)),    resident((1, z_dim)),   # e2
        resident((h_dim, z_dim)),    resident((1, z_dim)),   # e3
        resident((z_dim, h_dim)),    resident((1, h_dim)),   # d4
        resident((h_dim, para_dim)), resident((1, para_dim)),# d5
    ]
    out_specs = (act(para_dim), act(z_dim), act(z_dim))

    return pl.pallas_call(
        vae_forward_kernel,
        out_shape=(
            jax.ShapeDtypeStruct((n, para_dim), jnp.float32),
            jax.ShapeDtypeStruct((n, z_dim), jnp.float32),
            jax.ShapeDtypeStruct((n, z_dim), jnp.float32),
        ),
        grid=grid,
        in_specs=in_specs,
        out_specs=out_specs,
        compiler_params=pltpu.CompilerParams(
            dimension_semantics=("parallel",)),
    )(x, eps,
      p["w_e1"], p["b_e1"],
      p["w_e2"], p["b_e2"],
      p["w_e3"], p["b_e3"],
      p["w_d4"], p["b_d4"],
      p["w_d5"], p["b_d5"])


# ---------------------------------------------------------------------------
# Init + pure-JAX reference
# ---------------------------------------------------------------------------
def init_params(key, para_dim, h_dim, z_dim):
    """Deterministic init mimicking nn.Linear (uniform +-1/sqrt(fan_in))."""
    def linear(key, fan_in, fan_out):
        k1, k2 = jax.random.split(key)
        bound = 1.0 / np.sqrt(fan_in)
        w = jax.random.uniform(k1, (fan_in, fan_out), jnp.float32, -bound, bound)
        b = jax.random.uniform(k2, (1, fan_out), jnp.float32, -bound, bound)
        return w, b

    keys = jax.random.split(key, 5)
    w_e1, b_e1 = linear(keys[0], para_dim, h_dim)
    w_e2, b_e2 = linear(keys[1], h_dim, z_dim)
    w_e3, b_e3 = linear(keys[2], h_dim, z_dim)
    w_d4, b_d4 = linear(keys[3], z_dim, h_dim)
    w_d5, b_d5 = linear(keys[4], h_dim, para_dim)
    return dict(w_e1=w_e1, b_e1=b_e1, w_e2=w_e2, b_e2=b_e2,
                w_e3=w_e3, b_e3=b_e3, w_d4=w_d4, b_d4=b_d4,
                w_d5=w_d5, b_d5=b_d5)


def vae_forward_ref(x, eps, p):
    h = jnp.maximum(x @ p["w_e1"] + p["b_e1"], 0.0)
    mean = h @ p["w_e2"] + p["b_e2"]
    log_var = h @ p["w_e3"] + p["b_e3"]
    z = mean + jnp.exp(0.5 * log_var) * eps
    d = jnp.maximum(z @ p["w_d4"] + p["b_d4"], 0.0)
    out = d @ p["w_d5"] + p["b_d5"]
    return out, mean, log_var


def _check(x, eps, params):
    out, mean, log_var = vae_forward(x, eps, params)
    jax.block_until_ready((out, mean, log_var))
    out_r, mean_r, logvar_r = vae_forward_ref(x, eps, params)
    np.testing.assert_allclose(np.asarray(out), np.asarray(out_r), rtol=1e-5, atol=1e-5)
    np.testing.assert_allclose(np.asarray(mean), np.asarray(mean_r), rtol=1e-5, atol=1e-5)
    np.testing.assert_allclose(np.asarray(log_var), np.asarray(logvar_r), rtol=1e-5, atol=1e-5)
    return out, mean, log_var


if __name__ == "__main__":
    # Dims implied by the PyTorch module setup.
    nq = 7
    n_layers = 5
    para_dim = n_layers * 2 * nq     # 70
    z_dim = 50
    h_dim = 64                       # 2 ** 6 (single hidden layer)
    batch = 4

    key = jax.random.PRNGKey(0)
    k_x, k_eps, k_params, k_x2, k_eps2 = jax.random.split(key, 5)
    params = init_params(k_params, para_dim, h_dim, z_dim)

    # 1) batch_size from the reference script (single full-dim block).
    x = jax.random.uniform(k_x, (batch, para_dim), jnp.float32)   # data_dist = U(0,1)
    eps = jax.random.normal(k_eps, (batch, z_dim), jnp.float32)
    out, mean, log_var = _check(x, eps, params)
    assert out.shape == (batch, para_dim)
    assert mean.shape == (batch, z_dim)
    assert log_var.shape == (batch, z_dim)

    # 2) non-divisible batch: exercises the multi-step grid (>=2 steps for v7x's
    #    two TensorCores) and Pallas' masked partial-block writeback.
    n2 = 100
    x2 = jax.random.uniform(k_x2, (n2, para_dim), jnp.float32)
    eps2 = jax.random.normal(k_eps2, (n2, z_dim), jnp.float32)
    _check(x2, eps2, params)

    # TODO(synk): decoder()'s PennyLane quantum circuit (qml.qnode expval of a
    # Hamiltonian) has no Pallas equivalent; forward() uses decoder_vec, which is
    # fully implemented here.
    print("KERNEL_OK")
</pallas_src>

<mosaic_0001>
module attributes {stable_mosaic.version = 11 : i64} {
  func.func @vae_forward_kernel(%arg0: i32, %arg1: memref<4x70xf32, #tpu.memory_space<vmem>>, %arg2: memref<4x50xf32, #tpu.memory_space<vmem>>, %arg3: memref<70x64xf32, #tpu.memory_space<vmem>>, %arg4: memref<1x64xf32, #tpu.memory_space<vmem>>, %arg5: memref<64x50xf32, #tpu.memory_space<vmem>>, %arg6: memref<1x50xf32, #tpu.memory_space<vmem>>, %arg7: memref<64x50xf32, #tpu.memory_space<vmem>>, %arg8: memref<1x50xf32, #tpu.memory_space<vmem>>, %arg9: memref<50x64xf32, #tpu.memory_space<vmem>>, %arg10: memref<1x64xf32, #tpu.memory_space<vmem>>, %arg11: memref<64x70xf32, #tpu.memory_space<vmem>>, %arg12: memref<1x70xf32, #tpu.memory_space<vmem>>, %arg13: memref<4x70xf32, #tpu.memory_space<vmem>>, %arg14: memref<4x50xf32, #tpu.memory_space<vmem>>, %arg15: memref<4x50xf32, #tpu.memory_space<vmem>>) attributes {dimension_semantics = [#tpu.dimension_semantics<parallel>], iteration_bounds = array<i64: 1>, scalar_prefetch = 0 : i64, scratch_operands = 0 : i64, tpu.core_type = #tpu.core_type<tc>, window_params = [{transform_indices = @transform_0, window_bounds = array<i64: 4, 70>}, {transform_indices = @transform_1, window_bounds = array<i64: 4, 50>}, {pipeline_mode = #tpu.pipeline_mode<synchronous>, transform_indices = @transform_2, window_bounds = array<i64: 70, 64>}, {pipeline_mode = #tpu.pipeline_mode<synchronous>, transform_indices = @transform_3, window_bounds = array<i64: 1, 64>}, {pipeline_mode = #tpu.pipeline_mode<synchronous>, transform_indices = @transform_4, window_bounds = array<i64: 64, 50>}, {pipeline_mode = #tpu.pipeline_mode<synchronous>, transform_indices = @transform_5, window_bounds = array<i64: 1, 50>}, {pipeline_mode = #tpu.pipeline_mode<synchronous>, transform_indices = @transform_6, window_bounds = array<i64: 64, 50>}, {pipeline_mode = #tpu.pipeline_mode<synchronous>, transform_indices = @transform_7, window_bounds = array<i64: 1, 50>}, {pipeline_mode = #tpu.pipeline_mode<synchronous>, transform_indices = @transform_8, window_bounds = array<i64: 50, 64>}, {pipeline_mode = #tpu.pipeline_mode<synchronous>, transform_indices = @transform_9, window_bounds = array<i64: 1, 64>}, {pipeline_mode = #tpu.pipeline_mode<synchronous>, transform_indices = @transform_10, window_bounds = array<i64: 64, 70>}, {pipeline_mode = #tpu.pipeline_mode<synchronous>, transform_indices = @transform_11, window_bounds = array<i64: 1, 70>}, {transform_indices = @transform_12, window_bounds = array<i64: 4, 70>}, {transform_indices = @transform_13, window_bounds = array<i64: 4, 50>}, {transform_indices = @transform_14, window_bounds = array<i64: 4, 50>}]} {
    %c0 = arith.constant 0 : index
    %c0_0 = arith.constant 0 : index
    %0 = vector.load %arg1[%c0, %c0_0] : memref<4x70xf32, #tpu.memory_space<vmem>>, vector<4x70xf32>
    %c0_1 = arith.constant 0 : index
    %c0_2 = arith.constant 0 : index
    %1 = vector.load %arg3[%c0_1, %c0_2] : memref<70x64xf32, #tpu.memory_space<vmem>>, vector<70x64xf32>
    %cst = arith.constant dense<0.000000e+00> : vector<4x64xf32>
    %2 = tpu.matmul %0, %1, %cst {dimension_numbers = #tpu.dot_dimension_numbers<[1], [0], [0], [1], [0, 0, 1, 1], [], []>, precision = #tpu.contract_precision<fp32>} : vector<4x70xf32>, vector<70x64xf32>, vector<4x64xf32> -> vector<4x64xf32>
    %c0_3 = arith.constant 0 : index
    %c0_4 = arith.constant 0 : index
    %3 = vector.load %arg4[%c0_3, %c0_4] : memref<1x64xf32, #tpu.memory_space<vmem>>, vector<1x64xf32>
    %4 = vector.broadcast %3 : vector<1x64xf32> to vector<4x64xf32>
    %5 = arith.addf %2, %4 : vector<4x64xf32>
    %cst_5 = arith.constant 0.000000e+00 : f32
    %6 = vector.broadcast %cst_5 : f32 to vector<4x64xf32>
    %7 = arith.maximumf %5, %6 : vector<4x64xf32>
    %c0_6 = arith.constant 0 : index
    %c0_7 = arith.constant 0 : index
    %8 = vector.load %arg5[%c0_6, %c0_7] : memref<64x50xf32, #tpu.memory_space<vmem>>, vector<64x50xf32>
    %cst_8 = arith.constant dense<0.000000e+00> : vector<4x50xf32>
    %9 = tpu.matmul %7, %8, %cst_8 {dimension_numbers = #tpu.dot_dimension_numbers<[1], [0], [0], [1], [0, 0, 1, 1], [], []>, precision = #tpu.contract_precision<fp32>} : vector<4x64xf32>, vector<64x50xf32>, vector<4x50xf32> -> vector<4x50xf32>
    %c0_9 = arith.constant 0 : index
    %c0_10 = arith.constant 0 : index
    %10 = vector.load %arg6[%c0_9, %c0_10] : memref<1x50xf32, #tpu.memory_space<vmem>>, vector<1x50xf32>
    %11 = vector.broadcast %10 : vector<1x50xf32> to vector<4x50xf32>
    %12 = arith.addf %9, %11 : vector<4x50xf32>
    %c0_11 = arith.constant 0 : index
    %c0_12 = arith.constant 0 : index
    %13 = vector.load %arg7[%c0_11, %c0_12] : memref<64x50xf32, #tpu.memory_space<vmem>>, vector<64x50xf32>
    %cst_13 = arith.constant dense<0.000000e+00> : vector<4x50xf32>
    %14 = tpu.matmul %7, %13, %cst_13 {dimension_numbers = #tpu.dot_dimension_numbers<[1], [0], [0], [1], [0, 0, 1, 1], [], []>, precision = #tpu.contract_precision<fp32>} : vector<4x64xf32>, vector<64x50xf32>, vector<4x50xf32> -> vector<4x50xf32>
    %c0_14 = arith.constant 0 : index
    %c0_15 = arith.constant 0 : index
    %15 = vector.load %arg8[%c0_14, %c0_15] : memref<1x50xf32, #tpu.memory_space<vmem>>, vector<1x50xf32>
    %16 = vector.broadcast %15 : vector<1x50xf32> to vector<4x50xf32>
    %17 = arith.addf %14, %16 : vector<4x50xf32>
    %cst_16 = arith.constant 5.000000e-01 : f32
    %18 = vector.broadcast %cst_16 : f32 to vector<4x50xf32>
    %19 = arith.mulf %18, %17 : vector<4x50xf32>
    %20 = math.exp %19 : vector<4x50xf32>
    %c0_17 = arith.constant 0 : index
    %c0_18 = arith.constant 0 : index
    %21 = vector.load %arg2[%c0_17, %c0_18] : memref<4x50xf32, #tpu.memory_space<vmem>>, vector<4x50xf32>
    %22 = arith.mulf %20, %21 : vector<4x50xf32>
    %23 = arith.addf %12, %22 : vector<4x50xf32>
    %c0_19 = arith.constant 0 : index
    %c0_20 = arith.constant 0 : index
    %24 = vector.load %arg9[%c0_19, %c0_20] : memref<50x64xf32, #tpu.memory_space<vmem>>, vector<50x64xf32>
    %cst_21 = arith.constant dense<0.000000e+00> : vector<4x64xf32>
    %25 = tpu.matmul %23, %24, %cst_21 {dimension_numbers = #tpu.dot_dimension_numbers<[1], [0], [0], [1], [0, 0, 1, 1], [], []>, precision = #tpu.contract_precision<fp32>} : vector<4x50xf32>, vector<50x64xf32>, vector<4x64xf32> -> vector<4x64xf32>
    %c0_22 = arith.constant 0 : index
    %c0_23 = arith.constant 0 : index
    %26 = vector.load %arg10[%c0_22, %c0_23] : memref<1x64xf32, #tpu.memory_space<vmem>>, vector<1x64xf32>
    %27 = vector.broadcast %26 : vector<1x64xf32> to vector<4x64xf32>
    %28 = arith.addf %25, %27 : vector<4x64xf32>
    %cst_24 = arith.constant 0.000000e+00 : f32
    %29 = vector.broadcast %cst_24 : f32 to vector<4x64xf32>
    %30 = arith.maximumf %28, %29 : vector<4x64xf32>
    %c0_25 = arith.constant 0 : index
    %c0_26 = arith.constant 0 : index
    %31 = vector.load %arg11[%c0_25, %c0_26] : memref<64x70xf32, #tpu.memory_space<vmem>>, vector<64x70xf32>
    %cst_27 = arith.constant dense<0.000000e+00> : vector<4x70xf32>
    %32 = tpu.matmul %30, %31, %cst_27 {dimension_numbers = #tpu.dot_dimension_numbers<[1], [0], [0], [1], [0, 0, 1, 1], [], []>, precision = #tpu.contract_precision<fp32>} : vector<4x64xf32>, vector<64x70xf32>, vector<4x70xf32> -> vector<4x70xf32>
    %c0_28 = arith.constant 0 : index
    %c0_29 = arith.constant 0 : index
    %33 = vector.load %arg12[%c0_28, %c0_29] : memref<1x70xf32, #tpu.memory_space<vmem>>, vector<1x70xf32>
    %34 = vector.broadcast %33 : vector<1x70xf32> to vector<4x70xf32>
    %35 = arith.addf %32, %34 : vector<4x70xf32>
    %c0_30 = arith.constant 0 : index
    %c0_31 = arith.constant 0 : index
    %36 = vector.load %arg13[%c0_30, %c0_31] : memref<4x70xf32, #tpu.memory_space<vmem>>, vector<4x70xf32>
    tpu.vector_store %arg13[%c0_30, %c0_31], %35 {strides = array<i32>} : memref<4x70xf32, #tpu.memory_space<vmem>>, vector<4x70xf32>,
    %c0_32 = arith.constant 0 : index
    %c0_33 = arith.constant 0 : index
    %37 = vector.load %arg14[%c0_32, %c0_33] : memref<4x50xf32, #tpu.memory_space<vmem>>, vector<4x50xf32>
    tpu.vector_store %arg14[%c0_32, %c0_33], %12 {strides = array<i32>} : memref<4x50xf32, #tpu.memory_space<vmem>>, vector<4x50xf32>,
    %c0_34 = arith.constant 0 : index
    %c0_35 = arith.constant 0 : index
    %38 = vector.load %arg15[%c0_34, %c0_35] : memref<4x50xf32, #tpu.memory_space<vmem>>, vector<4x50xf32>
    tpu.vector_store %arg15[%c0_34, %c0_35], %17 {strides = array<i32>} : memref<4x50xf32, #tpu.memory_space<vmem>>, vector<4x50xf32>,
    return
  }
  func.func @transform_0(%arg0: i32) -> (i32, i32) {
    %c0_i32 = arith.constant 0 : i32
    %c0_i32_0 = arith.constant 0 : i32
    return %arg0, %c0_i32 : i32, i32
  }
  func.func @transform_1(%arg0: i32) -> (i32, i32) {
    %c0_i32 = arith.constant 0 : i32
    %c0_i32_0 = arith.constant 0 : i32
    return %arg0, %c0_i32 : i32, i32
  }
  func.func @transform_2(%arg0: i32) -> (i32, i32) {
    %c0_i32 = arith.constant 0 : i32
    %c0_i32_0 = arith.constant 0 : i32
    %c0_i32_1 = arith.constant 0 : i32
    return %c0_i32, %c0_i32_0 : i32, i32
  }
  func.func @transform_3(%arg0: i32) -> (i32, i32) {
    %c0_i32 = arith.constant 0 : i32
    %c0_i32_0 = arith.constant 0 : i32
    %c0_i32_1 = arith.constant 0 : i32
    return %c0_i32, %c0_i32_0 : i32, i32
  }
  func.func @transform_4(%arg0: i32) -> (i32, i32) {
    %c0_i32 = arith.constant 0 : i32
    %c0_i32_0 = arith.constant 0 : i32
    %c0_i32_1 = arith.constant 0 : i32
    return %c0_i32, %c0_i32_0 : i32, i32
  }
  func.func @transform_5(%arg0: i32) -> (i32, i32) {
    %c0_i32 = arith.constant 0 : i32
    %c0_i32_0 = arith.constant 0 : i32
    %c0_i32_1 = arith.constant 0 : i32
    return %c0_i32, %c0_i32_0 : i32, i32
  }
  func.func @transform_6(%arg0: i32) -> (i32, i32) {
    %c0_i32 = arith.constant 0 : i32
    %c0_i32_0 = arith.constant 0 : i32
    %c0_i32_1 = arith.constant 0 : i32
    return %c0_i32, %c0_i32_0 : i32, i32
  }
  func.func @transform_7(%arg0: i32) -> (i32, i32) {
    %c0_i32 = arith.constant 0 : i32
    %c0_i32_0 = arith.constant 0 : i32
    %c0_i32_1 = arith.constant 0 : i32
    return %c0_i32, %c0_i32_0 : i32, i32
  }
  func.func @transform_8(%arg0: i32) -> (i32, i32) {
    %c0_i32 = arith.constant 0 : i32
    %c0_i32_0 = arith.constant 0 : i32
    %c0_i32_1 = arith.constant 0 : i32
    return %c0_i32, %c0_i32_0 : i32, i32
  }
  func.func @transform_9(%arg0: i32) -> (i32, i32) {
    %c0_i32 = arith.constant 0 : i32
    %c0_i32_0 = arith.constant 0 : i32
    %c0_i32_1 = arith.constant 0 : i32
    return %c0_i32, %c0_i32_0 : i32, i32
  }
  func.func @transform_10(%arg0: i32) -> (i32, i32) {
    %c0_i32 = arith.constant 0 : i32
    %c0_i32_0 = arith.constant 0 : i32
    %c0_i32_1 = arith.constant 0 : i32
    return %c0_i32, %c0_i32_0 : i32, i32
  }
  func.func @transform_11(%arg0: i32) -> (i32, i32) {
    %c0_i32 = arith.constant 0 : i32
    %c0_i32_0 = arith.constant 0 : i32
    %c0_i32_1 = arith.constant 0 : i32
    return %c0_i32, %c0_i32_0 : i32, i32
  }
  func.func @transform_12(%arg0: i32) -> (i32, i32) {
    %c0_i32 = arith.constant 0 : i32
    %c0_i32_0 = arith.constant 0 : i32
    return %arg0, %c0_i32 : i32, i32
  }
  func.func @transform_13(%arg0: i32) -> (i32, i32) {
    %c0_i32 = arith.constant 0 : i32
    %c0_i32_0 = arith.constant 0 : i32
    return %arg0, %c0_i32 : i32, i32
  }
  func.func @transform_14(%arg0: i32) -> (i32, i32) {
    %c0_i32 = arith.constant 0 : i32
    %c0_i32_0 = arith.constant 0 : i32
    return %arg0, %c0_i32 : i32, i32
  }
}

</mosaic_0001>

<llo_original>
// kernel: tpu_custom_call.1
$region0: #{tpu_custom_call.1}
  #allocation0 [shape = 'u32[]', space=smem, size = 0x4, offset = 0x4, fixed_abs, tag = 'smem constant byte address 0x4 - core index']
  #allocation1 [shape = 'u32[144,128]{1,0:T(1,128)}', space=vmem, size = 0x12000, scoped, tag = 'internal scratch']
  %s0 = inlined_call_operand.vmem [shape: f32[4,70], index: 0, kind: input, shape index: {}]
  %s1 = inlined_call_operand.vmem [shape: f32[4,50], index: 1, kind: input, shape index: {}]
  %s2 = inlined_call_operand.vmem [shape: f32[70,64], index: 2, kind: input, shape index: {}]
  %s3 = inlined_call_operand.vmem [shape: f32[1,64], index: 3, kind: input, shape index: {}]
  %s4 = inlined_call_operand.vmem [shape: f32[64,50], index: 4, kind: input, shape index: {}]
  %s5 = inlined_call_operand.vmem [shape: f32[1,50], index: 5, kind: input, shape index: {}]
  %s6 = inlined_call_operand.vmem [shape: f32[64,50], index: 6, kind: input, shape index: {}]
  %s7 = inlined_call_operand.vmem [shape: f32[1,50], index: 7, kind: input, shape index: {}]
  %s8 = inlined_call_operand.vmem [shape: f32[50,64], index: 8, kind: input, shape index: {}]
  %s9 = inlined_call_operand.vmem [shape: f32[1,64], index: 9, kind: input, shape index: {}]
  %s10 = inlined_call_operand.vmem [shape: f32[64,70], index: 10, kind: input, shape index: {}]
  %s11 = inlined_call_operand.vmem [shape: f32[1,70], index: 11, kind: input, shape index: {}]
  %s12 = inlined_call_operand.hbm [shape: f32[4,70], index: 12, kind: output, shape index: {0}]
  %s13 = inlined_call_operand.hbm [shape: f32[4,50], index: 13, kind: output, shape index: {1}]
  %s14 = inlined_call_operand.hbm [shape: f32[4,50], index: 14, kind: output, shape index: {2}]
  %15 = xla_tuple %s12, %s13, %s14
  %s16 = sld [smem:[#allocation0]]
  $region74: #{tpu_custom_call.1} parent=0
    _
  %s18 = ssub.s32 1, %s16
  %s19 = scalar_select 0, %s18, %s16
  $region1: #{tpu_custom_call.1} parent=0
    #allocation2 [shape = 'u8[2048]{0}', space=vmem, size = 0x800, scoped, tag = 'output window, operand 0, single buffered']
    #allocation3 [shape = 's32[1]{0}', space=sflag, size = 0x4, scoped, tag = 'scoped memory for tpu_custom_call.1']
    #allocation4 [shape = 'u8[2048]{0}', space=vmem, size = 0x800, scoped, tag = 'output window, operand 1, single buffered']
    #allocation5 [shape = 's32[1]{0}', space=sflag, size = 0x4, scoped, tag = 'scoped memory for tpu_custom_call.1']
    #allocation6 [shape = 'u8[2048]{0}', space=vmem, size = 0x800, scoped, tag = 'output window, operand 2, single buffered']
    %20 = vsyncpa [#allocation3], 0
    %21 = vsyncpa [#allocation5], 0
    // Predicated region
    $region2: #{tpu_custom_call.1} parent=1 // pred_check
      _
    $region3: #{tpu_custom_call.1} parent=1 // pred_check_branch
      %23 = sbr.rel (0) target = $region5
    $region4: #{tpu_custom_call.1} parent=1 // pred_region
      _
    $region5: #{tpu_custom_call.1} parent=1 // pred_fallthru
      _
    // Predicated region
    $region6: #{tpu_custom_call.1} parent=1 // pred_check
      _
    $region7: #{tpu_custom_call.1} parent=1 // pred_check_branch
      %25 = sbr.rel (0) target = $region9
    $region8: #{tpu_custom_call.1} parent=1 // pred_region
      _
    $region9: #{tpu_custom_call.1} parent=1 // pred_fallthru
      _
    // Predicated region
    $region10: #{tpu_custom_call.1} parent=1 // pred_check
      _
    $region11: #{tpu_custom_call.1} parent=1 // pred_check_branch
      %27 = sbr.rel (0) target = $region13
    $region12: #{tpu_custom_call.1} parent=1 // pred_region
      _
    $region13: #{tpu_custom_call.1} parent=1 // pred_fallthru
      _
    // Predicated region
    $region14: #{tpu_custom_call.1} parent=1 // pred_check
      _
    $region15: #{tpu_custom_call.1} parent=1 // pred_check_branch
      %29 = sbr.rel (0) target = $region17
    $region16: #{tpu_custom_call.1} parent=1 // pred_region
      _
    $region17: #{tpu_custom_call.1} parent=1 // pred_fallthru
      _
    // Predicated region
    $region18: #{tpu_custom_call.1} parent=1 // pred_check
      _
    $region19: #{tpu_custom_call.1} parent=1 // pred_check_branch
      %31 = sbr.rel (0) target = $region21
    $region20: #{tpu_custom_call.1} parent=1 // pred_region
      _
    $region21: #{tpu_custom_call.1} parent=1 // pred_fallthru
      _
    // Predicated region
    $region22: #{tpu_custom_call.1} parent=1 // pred_check
      _
    $region23: #{tpu_custom_call.1} parent=1 // pred_check_branch
      %33 = sbr.rel (0) target = $region25
    $region24: #{tpu_custom_call.1} parent=1 // pred_region
      _
    $region25: #{tpu_custom_call.1} parent=1 // pred_fallthru
      _
    // Predicated region
    $region26: #{tpu_custom_call.1} parent=1 // pred_check
      _
    $region27: #{tpu_custom_call.1} parent=1 // pred_check_branch
      %35 = sbr.rel (0) target = $region29
    $region28: #{tpu_custom_call.1} parent=1 // pred_region
      _
    $region29: #{tpu_custom_call.1} parent=1 // pred_fallthru
      _
    // Predicated region
    $region30: #{tpu_custom_call.1} parent=1 // pred_check
      _
    $region31: #{tpu_custom_call.1} parent=1 // pred_check_branch
      %37 = sbr.rel (0) target = $region33
    $region32: #{tpu_custom_call.1} parent=1 // pred_region
      _
    $region33: #{tpu_custom_call.1} parent=1 // pred_fallthru
      _
    // Predicated region
    $region34: #{tpu_custom_call.1} parent=1 // pred_check
      _
    $region35: #{tpu_custom_call.1} parent=1 // pred_check_branch
      %39 = sbr.rel (0) target = $region37
    $region36: #{tpu_custom_call.1} parent=1 // pred_region
      _
    $region37: #{tpu_custom_call.1} parent=1 // pred_fallthru
      _
    // Predicated region
    $region38: #{tpu_custom_call.1} parent=1 // pred_check
      _
    $region39: #{tpu_custom_call.1} parent=1 // pred_check_branch
      %41 = sbr.rel (0) target = $region41
    $region40: #{tpu_custom_call.1} parent=1 // pred_region
      _
    $region41: #{tpu_custom_call.1} parent=1 // pred_fallthru
      _
    // Predicated region
    $region42: #{tpu_custom_call.1} parent=1 // pred_check
      _
    $region43: #{tpu_custom_call.1} parent=1 // pred_check_branch
      %43 = sbr.rel (0) target = $region45
    $region44: #{tpu_custom_call.1} parent=1 // pred_region
      _
    $region45: #{tpu_custom_call.1} parent=1 // pred_fallthru
      _
    // Predicated region
    $region46: #{tpu_custom_call.1} parent=1 // pred_check
      _
    $region47: #{tpu_custom_call.1} parent=1 // pred_check_branch
      %45 = sbr.rel (0) target = $region49
    $region48: #{tpu_custom_call.1} parent=1 // pred_region
      _
    $region49: #{tpu_custom_call.1} parent=1 // pred_fallthru
      _
    %v46 = vld [vmem:[%s0] sm:$0xf]
    %v47 = vld [vmem:[%s2] sm:$0xff]
    %v48 = vld [vmem:[%s2 + $0x8] sm:$0xff]
    %v49 = vld [vmem:[%s2 + $0x10] sm:$0xff]
    %v50 = vld [vmem:[%s2 + $0x18] sm:$0xff]
    %v51 = vld [vmem:[%s2 + $0x20] sm:$0xff]
    %v52 = vld [vmem:[%s2 + $0x28] sm:$0xff]
    %v53 = vld [vmem:[%s2 + $0x30] sm:$0xff]
    %v54 = vld [vmem:[%s2 + $0x38] sm:$0xff]
    %v55 = vld [vmem:[%s2 + $0x40] sm:$0x3f]
    %v56 = vld [vmem:[%s3] sm:$0x1]
    %v58 = vlaneseq
    %v59 = vshrl.u32 %v58, 7
    %v60 = vsub.s32 0, %v59
    %v61 = vrot.slane %v56, %v60
    %vm63 = vcmask 572416
    %v65 = vsel %vm63, %v46, 0
    %vm67 = vcmask 1045504
    %v69 = vsel %vm67, %v55, 0
    %71 = vmatprep.subr.mxu0 0.0
    %72 = vmatpush1.msra.mxu0 0.0
    %73 = vmatprep.subr.mxu0 0.0
    %74 = vmatpush1.msra.mxu0 0.0
    %75 = vmatprep.subr.mxu0 0.0
    %76 = vmatpush1.msra.mxu0 0.0
    %77 = vmatprep.subr.mxu0 0.0
    %78 = vmatpush1.msra.mxu0 0.0
    %79 = vmatprep.subr.mxu0 0.0
    %80 = vmatpush1.msra.mxu0 0.0
    %81 = vmatprep.subr.mxu0 0.0
    %82 = vmatpush1.msra.mxu0 0.0
    %83 = vmatprep.subr.mxu0 0.0
    %84 = vmatpush1.msra.mxu0 0.0
    %85 = vmatprep.subr.mxu0 0.0
    %v86 = vand.u32 %v69, 4294901760
    %87 = vmatpush1.msra.mxu0 %v86
    %88 = vmatprep.subr.mxu0 0.0
    %v89 = vand.u32 %v54, 4294901760
    %90 = vmatpush1.msra.mxu0 %v89
    %91 = vmatprep.subr.mxu0 0.0
    %v92 = vand.u32 %v53, 4294901760
    %93 = vmatpush1.msra.mxu0 %v92
    %94 = vmatprep.subr.mxu0 0.0
    %v95 = vand.u32 %v52, 4294901760
    %96 = vmatpush1.msra.mxu0 %v95
    %97 = vmatprep.subr.mxu0 0.0
    %v98 = vand.u32 %v51, 4294901760
    %99 = vmatpush1.msra.mxu0 %v98
    %100 = vmatprep.subr.mxu0 0.0
    %v101 = vand.u32 %v50, 4294901760
    %102 = vmatpush1.msra.mxu0 %v101
    %103 = vmatprep.subr.mxu0 0.0
    %v104 = vand.u32 %v49, 4294901760
    %105 = vmatpush1.msra.mxu0 %v104
    %106 = vmatprep.subr.mxu0 0.0
    %v107 = vand.u32 %v48, 4294901760
    %108 = vmatpush1.msra.mxu0 %v107
    %109 = vmatprep.subr.mxu0 0.0
    %v110 = vand.u32 %v47, 4294901760
    %111 = vmatpush1.msra.mxu0 %v110
    %112 = vmatprep.subr.mxu0 0.0
    %113 = vmatpush2.msra.mxu0 0.0
    %114 = vmatprep.subr.mxu0 0.0
    %115 = vmatpush2.msra.mxu0 0.0
    %116 = vmatprep.subr.mxu0 0.0
    %117 = vmatpush2.msra.mxu0 0.0
    %118 = vmatprep.subr.mxu0 0.0
    %119 = vmatpush2.msra.mxu0 0.0
    %120 = vmatprep.subr.mxu0 0.0
    %121 = vmatpush2.msra.mxu0 0.0
    %122 = vmatprep.subr.mxu0 0.0
    %123 = vmatpush2.msra.mxu0 0.0
    %124 = vmatprep.subr.mxu0 0.0
    %125 = vmatpush2.msra.mxu0 0.0
    %126 = vmatprep.subr.mxu0 0.0
    %127 = vmatpush2.msra.mxu0 0.0
    %128 = vmatprep.subr.mxu0 0.0
    %129 = vmatpush2.msra.mxu0 0.0
    %130 = vmatprep.subr.mxu0 0.0
    %131 = vmatpush2.msra.mxu0 0.0
    %132 = vmatprep.subr.mxu0 0.0
    %133 = vmatpush2.msra.mxu0 0.0
    %134 = vmatprep.subr.mxu0 0.0
    %135 = vmatpush2.msra.mxu0 0.0
    %136 = vmatprep.subr.mxu0 0.0
    %137 = vmatpush2.msra.mxu0 0.0
    %138 = vmatprep.subr.mxu0 0.0
    %139 = vmatpush2.msra.mxu0 0.0
    %140 = vmatprep.subr.mxu0 0.0
    %141 = vmatpush2.msra.mxu0 0.0
    %142 = vmatprep.subr.mxu0 0.0
    %143 = vmatpush2.msra.mxu0 0.0
    %144 = vmatprep.mubr.f32.mxu0 0.0
    %v145 = vand.u32 %v65, 4294901760
    %v146 = vsub.f32 %v65, %v145
    %v147 = vand.u32 %v146, 4294901760
    %v148 = vsub.f32 %v146, %v147
    %v149 = vand.u32 %v148, 4294901760
    %150 = vmatmul.mubr.f32.gmra.mxu0 %v149
    %v151 = vpop.f32.mrf.mxu0
    %v152 = vadd.f32 %v61, %v151
    %v153 = vpop.f32.mrf.mxu0
    %154 = vdwg.mxu0
    %155 = vmatprep.subr.mxu0 0.0
    %156 = vmatpush1.msra.mxu0 0.0
    %157 = vmatprep.subr.mxu0 0.0
    %158 = vmatpush1.msra.mxu0 0.0
    %159 = vmatprep.subr.mxu0 0.0
    %160 = vmatpush1.msra.mxu0 0.0
    %161 = vmatprep.subr.mxu0 0.0
    %162 = vmatpush1.msra.mxu0 0.0
    %163 = vmatprep.subr.mxu0 0.0
    %164 = vmatpush1.msra.mxu0 0.0
    %165 = vmatprep.subr.mxu0 0.0
    %166 = vmatpush1.msra.mxu0 0.0
    %167 = vmatprep.subr.mxu0 0.0
    %168 = vmatpush1.msra.mxu0 0.0
    %169 = vmatprep.subr.mxu0 0.0
    %v170 = vand.u32 %v69, 4294901760
    %v171 = vsub.f32 %v69, %v170
    %v172 = vand.u32 %v171, 4294901760
    %v173 = vsub.f32 %v171, %v172
    %v174 = vand.u32 %v173, 4294901760
    %175 = vmatpush1.msra.mxu0 %v174
    %176 = vmatprep.subr.mxu0 0.0
    %v177 = vand.u32 %v54, 4294901760
    %v178 = vsub.f32 %v54, %v177
    %v179 = vand.u32 %v178, 4294901760
    %v180 = vsub.f32 %v178, %v179
    %v181 = vand.u32 %v180, 4294901760
    %182 = vmatpush1.msra.mxu0 %v181
    %183 = vmatprep.subr.mxu0 0.0
    %v184 = vand.u32 %v53, 4294901760
    %v185 = vsub.f32 %v53, %v184
    %v186 = vand.u32 %v185, 4294901760
    %v187 = vsub.f32 %v185, %v186
    %v188 = vand.u32 %v187, 4294901760
    %189 = vmatpush1.msra.mxu0 %v188
    %190 = vmatprep.subr.mxu0 0.0
    %v191 = vand.u32 %v52, 4294901760
    %v192 = vsub.f32 %v52, %v191
    %v193 = vand.u32 %v192, 4294901760
    %v194 = vsub.f32 %v192, %v193
    %v195 = vand.u32 %v194, 4294901760
    %196 = vmatpush1.msra.mxu0 %v195
    %197 = vmatprep.subr.mxu0 0.0
    %v198 = vand.u32 %v51, 4294901760
    %v199 = vsub.f32 %v51, %v198
    %v200 = vand.u32 %v199, 4294901760
    %v201 = vsub.f32 %v199, %v200
    %v202 = vand.u32 %v201, 4294901760
    %203 = vmatpush1.msra.mxu0 %v202
    %204 = vmatprep.subr.mxu0 0.0
    %v205 = vand.u32 %v50, 4294901760
    %v206 = vsub.f32 %v50, %v205
    %v207 = vand.u32 %v206, 4294901760
    %v208 = vsub.f32 %v206, %v207
    %v209 = vand.u32 %v208, 4294901760
    %210 = vmatpush1.msra.mxu0 %v209
    %211 = vmatprep.subr.mxu0 0.0
    %v212 = vand.u32 %v49, 4294901760
    %v213 = vsub.f32 %v49, %v212
    %v214 = vand.u32 %v213, 4294901760
    %v215 = vsub.f32 %v213, %v214
    %v216 = vand.u32 %v215, 4294901760
    %217 = vmatpush1.msra.mxu0 %v216
    %218 = vmatprep.subr.mxu0 0.0
    %v219 = vand.u32 %v48, 4294901760
    %v220 = vsub.f32 %v48, %v219
    %v221 = vand.u32 %v220, 4294901760
    %v222 = vsub.f32 %v220, %v221
    %v223 = vand.u32 %v222, 4294901760
    %224 = vmatpush1.msra.mxu0 %v223
    %225 = vmatprep.subr.mxu0 0.0
    %v226 = vand.u32 %v47, 4294901760
    %v227 = vsub.f32 %v47, %v226
    %v228 = vand.u32 %v227, 4294901760
    %v229 = vsub.f32 %v227, %v228
    %v230 = vand.u32 %v229, 4294901760
    %231 = vmatpush1.msra.mxu0 %v230
    %232 = vmatprep.subr.mxu0 0.0
    %233 = vmatpush2.msra.mxu0 0.0
    %234 = vmatprep.subr.mxu0 0.0
    %235 = vmatpush2.msra.mxu0 0.0
    %236 = vmatprep.subr.mxu0 0.0
    %237 = vmatpush2.msra.mxu0 0.0
    %238 = vmatprep.subr.mxu0 0.0
    %239 = vmatpush2.msra.mxu0 0.0
    %240 = vmatprep.subr.mxu0 0.0
    %241 = vmatpush2.msra.mxu0 0.0
    %242 = vmatprep.subr.mxu0 0.0
    %243 = vmatpush2.msra.mxu0 0.0
    %244 = vmatprep.subr.mxu0 0.0
    %245 = vmatpush2.msra.mxu0 0.0
    %246 = vmatprep.subr.mxu0 0.0
    %247 = vmatpush2.msra.mxu0 0.0
    %248 = vmatprep.subr.mxu0 0.0
    %249 = vmatpush2.msra.mxu0 0.0
    %250 = vmatprep.subr.mxu0 0.0
    %251 = vmatpush2.msra.mxu0 0.0
    %252 = vmatprep.subr.mxu0 0.0
    %253 = vmatpush2.msra.mxu0 0.0
    %254 = vmatprep.subr.mxu0 0.0
    %255 = vmatpush2.msra.mxu0 0.0
    %256 = vmatprep.subr.mxu0 0.0
    %257 = vmatpush2.msra.mxu0 0.0
    %258 = vmatprep.subr.mxu0 0.0
    %259 = vmatpush2.msra.mxu0 0.0
    %260 = vmatprep.subr.mxu0 0.0
    %261 = vmatpush2.msra.mxu0 0.0
    %262 = vmatprep.subr.mxu0 0.0
    %263 = vmatpush2.msra.mxu0 0.0
    %264 = vmatprep.mubr.f32.mxu0 0.0
    %v265 = vand.u32 %v65, 4294901760
    %266 = vmatmul.mubr.f32.gmra.mxu0 %v265
    %v267 = vpop.f32.mrf.mxu0
    %v268 = vadd.f32 %v152, %v267
    %v269 = vpop.f32.mrf.mxu0
    %270 = vdwg.mxu0
    %271 = vmatprep.subr.mxu0 0.0
    %272 = vmatpush1.msra.mxu0 0.0
    %273 = vmatprep.subr.mxu0 0.0
    %274 = vmatpush1.msra.mxu0 0.0
    %275 = vmatprep.subr.mxu0 0.0
    %276 = vmatpush1.msra.mxu0 0.0
    %277 = vmatprep.subr.mxu0 0.0
    %278 = vmatpush1.msra.mxu0 0.0
    %279 = vmatprep.subr.mxu0 0.0
    %280 = vmatpush1.msra.mxu0 0.0
    %281 = vmatprep.subr.mxu0 0.0
    %282 = vmatpush1.msra.mxu0 0.0
    %283 = vmatprep.subr.mxu0 0.0
    %284 = vmatpush1.msra.mxu0 0.0
    %285 = vmatprep.subr.mxu0 0.0
    %v286 = vand.u32 %v69, 4294901760
    %v287 = vsub.f32 %v69, %v286
    %288 = vmatpush1.msra.mxu0 %v287
    %289 = vmatprep.subr.mxu0 0.0
    %v290 = vand.u32 %v54, 4294901760
    %v291 = vsub.f32 %v54, %v290
    %292 = vmatpush1.msra.mxu0 %v291
    %293 = vmatprep.subr.mxu0 0.0
    %v294 = vand.u32 %v53, 4294901760
    %v295 = vsub.f32 %v53, %v294
    %296 = vmatpush1.msra.mxu0 %v295
    %297 = vmatprep.subr.mxu0 0.0
    %v298 = vand.u32 %v52, 4294901760
    %v299 = vsub.f32 %v52, %v298
    %300 = vmatpush1.msra.mxu0 %v299
    %301 = vmatprep.subr.mxu0 0.0
    %v302 = vand.u32 %v51, 4294901760
    %v303 = vsub.f32 %v51, %v302
    %304 = vmatpush1.msra.mxu0 %v303
    %305 = vmatprep.subr.mxu0 0.0
    %v306 = vand.u32 %v50, 4294901760
    %v307 = vsub.f32 %v50, %v306
    %308 = vmatpush1.msra.mxu0 %v307
    %309 = vmatprep.subr.mxu0 0.0
    %v310 = vand.u32 %v49, 4294901760
    %v311 = vsub.f32 %v49, %v310
    %312 = vmatpush1.msra.mxu0 %v311
    %313 = vmatprep.subr.mxu0 0.0
    %v314 = vand.u32 %v48, 4294901760
    %v315 = vsub.f32 %v48, %v314
    %316 = vmatpush1.msra.mxu0 %v315
    %317 = vmatprep.subr.mxu0 0.0
    %v318 = vand.u32 %v47, 4294901760
    %v319 = vsub.f32 %v47, %v318
    %320 = vmatpush1.msra.mxu0 %v319
    %321 = vmatprep.subr.mxu0 0.0
    %322 = vmatpush2.msra.mxu0 0.0
    %323 = vmatprep.subr.mxu0 0.0
    %324 = vmatpush2.msra.mxu0 0.0
    %325 = vmatprep.subr.mxu0 0.0
    %326 = vmatpush2.msra.mxu0 0.0
    %327 = vmatprep.subr.mxu0 0.0
    %328 = vmatpush2.msra.mxu0 0.0
    %329 = vmatprep.subr.mxu0 0.0
    %330 = vmatpush2.msra.mxu0 0.0
    %331 = vmatprep.subr.mxu0 0.0
    %332 = vmatpush2.msra.mxu0 0.0
    %333 = vmatprep.subr.mxu0 0.0
    %334 = vmatpush2.msra.mxu0 0.0
    %335 = vmatprep.subr.mxu0 0.0
    %336 = vmatpush2.msra.mxu0 0.0
    %337 = vmatprep.subr.mxu0 0.0
    %338 = vmatpush2.msra.mxu0 0.0
    %339 = vmatprep.subr.mxu0 0.0
    %340 = vmatpush2.msra.mxu0 0.0
    %341 = vmatprep.subr.mxu0 0.0
    %342 = vmatpush2.msra.mxu0 0.0
    %343 = vmatprep.subr.mxu0 0.0
    %344 = vmatpush2.msra.mxu0 0.0
    %345 = vmatprep.subr.mxu0 0.0
    %346 = vmatpush2.msra.mxu0 0.0
    %347 = vmatprep.subr.mxu0 0.0
    %348 = vmatpush2.msra.mxu0 0.0
    %349 = vmatprep.subr.mxu0 0.0
    %350 = vmatpush2.msra.mxu0 0.0
    %351 = vmatprep.subr.mxu0 0.0
    %352 = vmatpush2.msra.mxu0 0.0
    %353 = vmatprep.mubr.f32.mxu0 0.0
    %v354 = vand.u32 %v65, 4294901760
    %v355 = vsub.f32 %v65, %v354
    %356 = vmatmul.mubr.f32.gmra.mxu0 %v355
    %v357 = vpop.f32.mrf.mxu0
    %v358 = vadd.f32 %v268, %v357
    %v359 = vpop.f32.mrf.mxu0
    %360 = vdwg.mxu0
    %361 = vmatprep.subr.mxu0 0.0
    %362 = vmatpush1.msra.mxu0 0.0
    %363 = vmatprep.subr.mxu0 0.0
    %364 = vmatpush1.msra.mxu0 0.0
    %365 = vmatprep.subr.mxu0 0.0
    %366 = vmatpush1.msra.mxu0 0.0
    %367 = vmatprep.subr.mxu0 0.0
    %368 = vmatpush1.msra.mxu0 0.0
    %369 = vmatprep.subr.mxu0 0.0
    %370 = vmatpush1.msra.mxu0 0.0
    %371 = vmatprep.subr.mxu0 0.0
    %372 = vmatpush1.msra.mxu0 0.0
    %373 = vmatprep.subr.mxu0 0.0
    %374 = vmatpush1.msra.mxu0 0.0
    %375 = vmatprep.subr.mxu0 0.0
    %v376 = vand.u32 %v69, 4294901760
    %377 = vmatpush1.msra.mxu0 %v376
    %378 = vmatprep.subr.mxu0 0.0
    %v379 = vand.u32 %v54, 4294901760
    %380 = vmatpush1.msra.mxu0 %v379
    %381 = vmatprep.subr.mxu0 0.0
    %v382 = vand.u32 %v53, 4294901760
    %383 = vmatpush1.msra.mxu0 %v382
    %384 = vmatprep.subr.mxu0 0.0
    %v385 = vand.u32 %v52, 4294901760
    %386 = vmatpush1.msra.mxu0 %v385
    %387 = vmatprep.subr.mxu0 0.0
    %v388 = vand.u32 %v51, 4294901760
    %389 = vmatpush1.msra.mxu0 %v388
    %390 = vmatprep.subr.mxu0 0.0
    %v391 = vand.u32 %v50, 4294901760
    %392 = vmatpush1.msra.mxu0 %v391
    %393 = vmatprep.subr.mxu0 0.0
    %v394 = vand.u32 %v49, 4294901760
    %395 = vmatpush1.msra.mxu0 %v394
    %396 = vmatprep.subr.mxu0 0.0
    %v397 = vand.u32 %v48, 4294901760
    %398 = vmatpush1.msra.mxu0 %v397
    %399 = vmatprep.subr.mxu0 0.0
    %v400 = vand.u32 %v47, 4294901760
    %401 = vmatpush1.msra.mxu0 %v400
    %402 = vmatprep.subr.mxu0 0.0
    %403 = vmatpush2.msra.mxu0 0.0
    %404 = vmatprep.subr.mxu0 0.0
    %405 = vmatpush2.msra.mxu0 0.0
    %406 = vmatprep.subr.mxu0 0.0
    %407 = vmatpush2.msra.mxu0 0.0
    %408 = vmatprep.subr.mxu0 0.0
    %409 = vmatpush2.msra.mxu0 0.0
    %410 = vmatprep.subr.mxu0 0.0
    %411 = vmatpush2.msra.mxu0 0.0
    %412 = vmatprep.subr.mxu0 0.0
    %413 = vmatpush2.msra.mxu0 0.0
    %414 = vmatprep.subr.mxu0 0.0
    %415 = vmatpush2.msra.mxu0 0.0
    %416 = vmatprep.subr.mxu0 0.0
    %417 = vmatpush2.msra.mxu0 0.0
    %418 = vmatprep.subr.mxu0 0.0
    %419 = vmatpush2.msra.mxu0 0.0
    %420 = vmatprep.subr.mxu0 0.0
    %421 = vmatpush2.msra.mxu0 0.0
    %422 = vmatprep.subr.mxu0 0.0
    %423 = vmatpush2.msra.mxu0 0.0
    %424 = vmatprep.subr.mxu0 0.0
    %425 = vmatpush2.msra.mxu0 0.0
    %426 = vmatprep.subr.mxu0 0.0
    %427 = vmatpush2.msra.mxu0 0.0
    %428 = vmatprep.subr.mxu0 0.0
    %429 = vmatpush2.msra.mxu0 0.0
    %430 = vmatprep.subr.mxu0 0.0
    %431 = vmatpush2.msra.mxu0 0.0
    %432 = vmatprep.subr.mxu0 0.0
    %433 = vmatpush2.msra.mxu0 0.0
    %434 = vmatprep.mubr.f32.mxu0 0.0
    %v435 = vand.u32 %v65, 4294901760
    %v436 = vsub.f32 %v65, %v435
    %v437 = vand.u32 %v436, 4294901760
    %438 = vmatmul.mubr.f32.gmra.mxu0 %v437
    %v439 = vpop.f32.mrf.mxu0
    %v440 = vadd.f32 %v358, %v439
    %v441 = vpop.f32.mrf.mxu0
    %442 = vdwg.mxu0
    %443 = vmatprep.subr.mxu0 0.0
    %444 = vmatpush1.msra.mxu0 0.0
    %445 = vmatprep.subr.mxu0 0.0
    %446 = vmatpush1.msra.mxu0 0.0
    %447 = vmatprep.subr.mxu0 0.0
    %448 = vmatpush1.msra.mxu0 0.0
    %449 = vmatprep.subr.mxu0 0.0
    %450 = vmatpush1.msra.mxu0 0.0
    %451 = vmatprep.subr.mxu0 0.0
    %452 = vmatpush1.msra.mxu0 0.0
    %453 = vmatprep.subr.mxu0 0.0
    %454 = vmatpush1.msra.mxu0 0.0
    %455 = vmatprep.subr.mxu0 0.0
    %456 = vmatpush1.msra.mxu0 0.0
    %457 = vmatprep.subr.mxu0 0.0
    %v458 = vand.u32 %v69, 4294901760
    %v459 = vsub.f32 %v69, %v458
    %v460 = vand.u32 %v459, 4294901760
    %461 = vmatpush1.msra.mxu0 %v460
    %462 = vmatprep.subr.mxu0 0.0
    %v463 = vand.u32 %v54, 4294901760
    %v464 = vsub.f32 %v54, %v463
    %v465 = vand.u32 %v464, 4294901760
    %466 = vmatpush1.msra.mxu0 %v465
    %467 = vmatprep.subr.mxu0 0.0
    %v468 = vand.u32 %v53, 4294901760
    %v469 = vsub.f32 %v53, %v468
    %v470 = vand.u32 %v469, 4294901760
    %471 = vmatpush1.msra.mxu0 %v470
    %472 = vmatprep.subr.mxu0 0.0
    %v473 = vand.u32 %v52, 4294901760
    %v474 = vsub.f32 %v52, %v473
    %v475 = vand.u32 %v474, 4294901760
    %476 = vmatpush1.msra.mxu0 %v475
    %477 = vmatprep.subr.mxu0 0.0
    %v478 = vand.u32 %v51, 4294901760
    %v479 = vsub.f32 %v51, %v478
    %v480 = vand.u32 %v479, 4294901760
    %481 = vmatpush1.msra.mxu0 %v480
    %482 = vmatprep.subr.mxu0 0.0
    %v483 = vand.u32 %v50, 4294901760
    %v484 = vsub.f32 %v50, %v483
    %v485 = vand.u32 %v484, 4294901760
    %486 = vmatpush1.msra.mxu0 %v485
    %487 = vmatprep.subr.mxu0 0.0
    %v488 = vand.u32 %v49, 4294901760
    %v489 = vsub.f32 %v49, %v488
    %v490 = vand.u32 %v489, 4294901760
    %491 = vmatpush1.msra.mxu0 %v490
    %492 = vmatprep.subr.mxu0 0.0
    %v493 = vand.u32 %v48, 4294901760
    %v494 = vsub.f32 %v48, %v493
    %v495 = vand.u32 %v494, 4294901760
    %496 = vmatpush1.msra.mxu0 %v495
    %497 = vmatprep.subr.mxu0 0.0
    %v498 = vand.u32 %v47, 4294901760
    %v499 = vsub.f32 %v47, %v498
    %v500 = vand.u32 %v499, 4294901760
    %501 = vmatpush1.msra.mxu0 %v500
    %502 = vmatprep.subr.mxu0 0.0
    %503 = vmatpush2.msra.mxu0 0.0
    %504 = vmatprep.subr.mxu0 0.0
    %505 = vmatpush2.msra.mxu0 0.0
    %506 = vmatprep.subr.mxu0 0.0
    %507 = vmatpush2.msra.mxu0 0.0
    %508 = vmatprep.subr.mxu0 0.0
    %509 = vmatpush2.msra.mxu0 0.0
    %510 = vmatprep.subr.mxu0 0.0
    %511 = vmatpush2.msra.mxu0 0.0
    %512 = vmatprep.subr.mxu0 0.0
    %513 = vmatpush2.msra.mxu0 0.0
    %514 = vmatprep.subr.mxu0 0.0
    %515 = vmatpush2.msra.mxu0 0.0
    %516 = vmatprep.subr.mxu0 0.0
    %517 = vmatpush2.msra.mxu0 0.0
    %518 = vmatprep.subr.mxu0 0.0
    %519 = vmatpush2.msra.mxu0 0.0
    %520 = vmatprep.subr.mxu0 0.0
    %521 = vmatpush2.msra.mxu0 0.0
    %522 = vmatprep.subr.mxu0 0.0
    %523 = vmatpush2.msra.mxu0 0.0
    %524 = vmatprep.subr.mxu0 0.0
    %525 = vmatpush2.msra.mxu0 0.0
    %526 = vmatprep.subr.mxu0 0.0
    %527 = vmatpush2.msra.mxu0 0.0
    %528 = vmatprep.subr.mxu0 0.0
    %529 = vmatpush2.msra.mxu0 0.0
    %530 = vmatprep.subr.mxu0 0.0
    %531 = vmatpush2.msra.mxu0 0.0
    %532 = vmatprep.subr.mxu0 0.0
    %533 = vmatpush2.msra.mxu0 0.0
    %534 = vmatprep.mubr.f32.mxu0 0.0
    %v535 = vand.u32 %v65, 4294901760
    %536 = vmatmul.mubr.f32.gmra.mxu0 %v535
    %v537 = vpop.f32.mrf.mxu0
    %v538 = vadd.f32 %v440, %v537
    %v539 = vpop.f32.mrf.mxu0
    %540 = vdwg.mxu0
    %541 = vmatprep.subr.mxu0 0.0
    %542 = vmatpush1.msra.mxu0 0.0
    %543 = vmatprep.subr.mxu0 0.0
    %544 = vmatpush1.msra.mxu0 0.0
    %545 = vmatprep.subr.mxu0 0.0
    %546 = vmatpush1.msra.mxu0 0.0
    %547 = vmatprep.subr.mxu0 0.0
    %548 = vmatpush1.msra.mxu0 0.0
    %549 = vmatprep.subr.mxu0 0.0
    %550 = vmatpush1.msra.mxu0 0.0
    %551 = vmatprep.subr.mxu0 0.0
    %552 = vmatpush1.msra.mxu0 0.0
    %553 = vmatprep.subr.mxu0 0.0
    %554 = vmatpush1.msra.mxu0 0.0
    %555 = vmatprep.subr.mxu0 0.0
    %v556 = vand.u32 %v69, 4294901760
    %557 = vmatpush1.msra.mxu0 %v556
    %558 = vmatprep.subr.mxu0 0.0
    %v559 = vand.u32 %v54, 4294901760
    %560 = vmatpush1.msra.mxu0 %v559
    %561 = vmatprep.subr.mxu0 0.0
    %v562 = vand.u32 %v53, 4294901760
    %563 = vmatpush1.msra.mxu0 %v562
    %564 = vmatprep.subr.mxu0 0.0
    %v565 = vand.u32 %v52, 4294901760
    %566 = vmatpush1.msra.mxu0 %v565
    %567 = vmatprep.subr.mxu0 0.0
    %v568 = vand.u32 %v51, 4294901760
    %569 = vmatpush1.msra.mxu0 %v568
    %570 = vmatprep.subr.mxu0 0.0
    %v571 = vand.u32 %v50, 4294901760
    %572 = vmatpush1.msra.mxu0 %v571
    %573 = vmatprep.subr.mxu0 0.0
    %v574 = vand.u32 %v49, 4294901760
    %575 = vmatpush1.msra.mxu0 %v574
    %576 = vmatprep.subr.mxu0 0.0
    %v577 = vand.u32 %v48, 4294901760
    %578 = vmatpush1.msra.mxu0 %v577
    %579 = vmatprep.subr.mxu0 0.0
    %v580 = vand.u32 %v47, 4294901760
    %581 = vmatpush1.msra.mxu0 %v580
    %582 = vmatprep.subr.mxu0 0.0
    %583 = vmatpush2.msra.mxu0 0.0
    %584 = vmatprep.subr.mxu0 0.0
    %585 = vmatpush2.msra.mxu0 0.0
    %586 = vmatprep.subr.mxu0 0.0
    %587 = vmatpush2.msra.mxu0 0.0
    %588 = vmatprep.subr.mxu0 0.0
    %589 = vmatpush2.msra.mxu0 0.0
    %590 = vmatprep.subr.mxu0 0.0
    %591 = vmatpush2.msra.mxu0 0.0
    %592 = vmatprep.subr.mxu0 0.0
    %593 = vmatpush2.msra.mxu0 0.0
    %594 = vmatprep.subr.mxu0 0.0
    %595 = vmatpush2.msra.mxu0 0.0
    %596 = vmatprep.subr.mxu0 0.0
    %597 = vmatpush2.msra.mxu0 0.0
    %598 = vmatprep.subr.mxu0 0.0
    %599 = vmatpush2.msra.mxu0 0.0
    %600 = vmatprep.subr.mxu0 0.0
    %601 = vmatpush2.msra.mxu0 0.0
    %602 = vmatprep.subr.mxu0 0.0
    %603 = vmatpush2.msra.mxu0 0.0
    %604 = vmatprep.subr.mxu0 0.0
    %605 = vmatpush2.msra.mxu0 0.0
    %606 = vmatprep.subr.mxu0 0.0
    %607 = vmatpush2.msra.mxu0 0.0
    %608 = vmatprep.subr.mxu0 0.0
    %609 = vmatpush2.msra.mxu0 0.0
    %610 = vmatprep.subr.mxu0 0.0
    %611 = vmatpush2.msra.mxu0 0.0
    %612 = vmatprep.subr.mxu0 0.0
    %613 = vmatpush2.msra.mxu0 0.0
    %614 = vmatprep.mubr.f32.mxu0 0.0
    %v615 = vand.u32 %v65, 4294901760
    %616 = vmatmul.mubr.f32.gmra.mxu0 %v615
    %v617 = vpop.f32.mrf.mxu0
    %v618 = vadd.f32 %v538, %v617
    %v619 = vpop.f32.mrf.mxu0
    %620 = vdwg.mxu0
    %v621 = vmax.f32 %v618, 0.0
    %v622 = vld [vmem:[%s4] sm:$0xff]
    %v623 = vld [vmem:[%s4 + $0x8] sm:$0xff]
    %v624 = vld [vmem:[%s4 + $0x10] sm:$0xff]
    %v625 = vld [vmem:[%s4 + $0x18] sm:$0xff]
    %v626 = vld [vmem:[%s4 + $0x20] sm:$0xff]
    %v627 = vld [vmem:[%s4 + $0x28] sm:$0xff]
    %v628 = vld [vmem:[%s4 + $0x30] sm:$0xff]
    %v629 = vld [vmem:[%s4 + $0x38] sm:$0xff]
    %v630 = vld [vmem:[%s5] sm:$0x1]
    %v632 = vlaneseq
    %v633 = vshrl.u32 %v632, 7
    %v634 = vsub.s32 0, %v633
    %v635 = vrot.slane %v630, %v634
    %vm637 = vcmask 523264
    %v639 = vsel %vm637, %v621, 0
    %641 = vmatprep.subr.mxu0 0.0
    %642 = vmatpush1.msra.mxu0 0.0
    %643 = vmatprep.subr.mxu0 0.0
    %644 = vmatpush1.msra.mxu0 0.0
    %645 = vmatprep.subr.mxu0 0.0
    %646 = vmatpush1.msra.mxu0 0.0
    %647 = vmatprep.subr.mxu0 0.0
    %648 = vmatpush1.msra.mxu0 0.0
    %649 = vmatprep.subr.mxu0 0.0
    %650 = vmatpush1.msra.mxu0 0.0
    %651 = vmatprep.subr.mxu0 0.0
    %652 = vmatpush1.msra.mxu0 0.0
    %653 = vmatprep.subr.mxu0 0.0
    %654 = vmatpush1.msra.mxu0 0.0
    %655 = vmatprep.subr.mxu0 0.0
    %656 = vmatpush1.msra.mxu0 0.0
    %657 = vmatprep.subr.mxu0 0.0
    %v658 = vand.u32 %v629, 4294901760
    %659 = vmatpush1.msra.mxu0 %v658
    %660 = vmatprep.subr.mxu0 0.0
    %v661 = vand.u32 %v628, 4294901760
    %662 = vmatpush1.msra.mxu0 %v661
    %663 = vmatprep.subr.mxu0 0.0
    %v664 = vand.u32 %v627, 4294901760
    %665 = vmatpush1.msra.mxu0 %v664
    %666 = vmatprep.subr.mxu0 0.0
    %v667 = vand.u32 %v626, 4294901760
    %668 = vmatpush1.msra.mxu0 %v667
    %669 = vmatprep.subr.mxu0 0.0
    %v670 = vand.u32 %v625, 4294901760
    %671 = vmatpush1.msra.mxu0 %v670
    %672 = vmatprep.subr.mxu0 0.0
    %v673 = vand.u32 %v624, 4294901760
    %674 = vmatpush1.msra.mxu0 %v673
    %675 = vmatprep.subr.mxu0 0.0
    %v676 = vand.u32 %v623, 4294901760
    %677 = vmatpush1.msra.mxu0 %v676
    %678 = vmatprep.subr.mxu0 0.0
    %v679 = vand.u32 %v622, 4294901760
    %680 = vmatpush1.msra.mxu0 %v679
    %681 = vmatprep.subr.mxu0 0.0
    %682 = vmatpush2.msra.mxu0 0.0
    %683 = vmatprep.subr.mxu0 0.0
    %684 = vmatpush2.msra.mxu0 0.0
    %685 = vmatprep.subr.mxu0 0.0
    %686 = vmatpush2.msra.mxu0 0.0
    %687 = vmatprep.subr.mxu0 0.0
    %688 = vmatpush2.msra.mxu0 0.0
    %689 = vmatprep.subr.mxu0 0.0
    %690 = vmatpush2.msra.mxu0 0.0
    %691 = vmatprep.subr.mxu0 0.0
    %692 = vmatpush2.msra.mxu0 0.0
    %693 = vmatprep.subr.mxu0 0.0
    %694 = vmatpush2.msra.mxu0 0.0
    %695 = vmatprep.subr.mxu0 0.0
    %696 = vmatpush2.msra.mxu0 0.0
    %697 = vmatprep.subr.mxu0 0.0
    %698 = vmatpush2.msra.mxu0 0.0
    %699 = vmatprep.subr.mxu0 0.0
    %700 = vmatpush2.msra.mxu0 0.0
    %701 = vmatprep.subr.mxu0 0.0
    %702 = vmatpush2.msra.mxu0 0.0
    %703 = vmatprep.subr.mxu0 0.0
    %704 = vmatpush2.msra.mxu0 0.0
    %705 = vmatprep.subr.mxu0 0.0
    %706 = vmatpush2.msra.mxu0 0.0
    %707 = vmatprep.subr.mxu0 0.0
    %708 = vmatpush2.msra.mxu0 0.0
    %709 = vmatprep.subr.mxu0 0.0
    %710 = vmatpush2.msra.mxu0 0.0
    %711 = vmatprep.subr.mxu0 0.0
    %712 = vmatpush2.msra.mxu0 0.0
    %713 = vmatprep.mubr.f32.mxu0 0.0
    %v714 = vand.u32 %v639, 4294901760
    %v715 = vsub.f32 %v639, %v714
    %v716 = vand.u32 %v715, 4294901760
    %v717 = vsub.f32 %v715, %v716
    %v718 = vand.u32 %v717, 4294901760
    %719 = vmatmul.mubr.f32.gmra.mxu0 %v718
    %v720 = vpop.f32.mrf.mxu0
    %v721 = vadd.f32 %v635, %v720
    %v722 = vpop.f32.mrf.mxu0
    %723 = vdwg.mxu0
    %724 = vmatprep.subr.mxu0 0.0
    %725 = vmatpush1.msra.mxu0 0.0
    %726 = vmatprep.subr.mxu0 0.0
    %727 = vmatpush1.msra.mxu0 0.0
    %728 = vmatprep.subr.mxu0 0.0
    %729 = vmatpush1.msra.mxu0 0.0
    %730 = vmatprep.subr.mxu0 0.0
    %731 = vmatpush1.msra.mxu0 0.0
    %732 = vmatprep.subr.mxu0 0.0
    %733 = vmatpush1.msra.mxu0 0.0
    %734 = vmatprep.subr.mxu0 0.0
    %735 = vmatpush1.msra.mxu0 0.0
    %736 = vmatprep.subr.mxu0 0.0
    %737 = vmatpush1.msra.mxu0 0.0
    %738 = vmatprep.subr.mxu0 0.0
    %739 = vmatpush1.msra.mxu0 0.0
    %740 = vmatprep.subr.mxu0 0.0
    %v741 = vand.u32 %v629, 4294901760
    %v742 = vsub.f32 %v629, %v741
    %v743 = vand.u32 %v742, 4294901760
    %v744 = vsub.f32 %v742, %v743
    %v745 = vand.u32 %v744, 4294901760
    %746 = vmatpush1.msra.mxu0 %v745
    %747 = vmatprep.subr.mxu0 0.0
    %v748 = vand.u32 %v628, 4294901760
    %v749 = vsub.f32 %v628, %v748
    %v750 = vand.u32 %v749, 4294901760
    %v751 = vsub.f32 %v749, %v750
    %v752 = vand.u32 %v751, 4294901760
    %753 = vmatpush1.msra.mxu0 %v752
    %754 = vmatprep.subr.mxu0 0.0
    %v755 = vand.u32 %v627, 4294901760
    %v756 = vsub.f32 %v627, %v755
    %v757 = vand.u32 %v756, 4294901760
    %v758 = vsub.f32 %v756, %v757
    %v759 = vand.u32 %v758, 4294901760
    %760 = vmatpush1.msra.mxu0 %v759
    %761 = vmatprep.subr.mxu0 0.0
    %v762 = vand.u32 %v626, 4294901760
    %v763 = vsub.f32 %v626, %v762
    %v764 = vand.u32 %v763, 4294901760
    %v765 = vsub.f32 %v763, %v764
    %v766 = vand.u32 %v765, 4294901760
    %767 = vmatpush1.msra.mxu0 %v766
    %768 = vmatprep.subr.mxu0 0.0
    %v769 = vand.u32 %v625, 4294901760
    %v770 = vsub.f32 %v625, %v769
    %v771 = vand.u32 %v770, 4294901760
    %v772 = vsub.f32 %v770, %v771
    %v773 = vand.u32 %v772, 4294901760
    %774 = vmatpush1.msra.mxu0 %v773
    %775 = vmatprep.subr.mxu0 0.0
    %v776 = vand.u32 %v624, 4294901760
    %v777 = vsub.f32 %v624, %v776
    %v778 = vand.u32 %v777, 4294901760
    %v779 = vsub.f32 %v777, %v778
    %v780 = vand.u32 %v779, 4294901760
    %781 = vmatpush1.msra.mxu0 %v780
    %782 = vmatprep.subr.mxu0 0.0
    %v783 = vand.u32 %v623, 4294901760
    %v784 = vsub.f32 %v623, %v783
    %v785 = vand.u32 %v784, 4294901760
    %v786 = vsub.f32 %v784, %v785
    %v787 = vand.u32 %v786, 4294901760
    %788 = vmatpush1.msra.mxu0 %v787
    %789 = vmatprep.subr.mxu0 0.0
    %v790 = vand.u32 %v622, 4294901760
    %v791 = vsub.f32 %v622, %v790
    %v792 = vand.u32 %v791, 4294901760
    %v793 = vsub.f32 %v791, %v792
    %v794 = vand.u32 %v793, 4294901760
    %795 = vmatpush1.msra.mxu0 %v794
    %796 = vmatprep.subr.mxu0 0.0
    %797 = vmatpush2.msra.mxu0 0.0
    %798 = vmatprep.subr.mxu0 0.0
    %799 = vmatpush2.msra.mxu0 0.0
    %800 = vmatprep.subr.mxu0 0.0
    %801 = vmatpush2.msra.mxu0 0.0
    %802 = vmatprep.subr.mxu0 0.0
    %803 = vmatpush2.msra.mxu0 0.0
    %804 = vmatprep.subr.mxu0 0.0
    %805 = vmatpush2.msra.mxu0 0.0
    %806 = vmatprep.subr.mxu0 0.0
    %807 = vmatpush2.msra.mxu0 0.0
    %808 = vmatprep.subr.mxu0 0.0
    %809 = vmatpush2.msra.mxu0 0.0
    %810 = vmatprep.subr.mxu0 0.0
    %811 = vmatpush2.msra.mxu0 0.0
    %812 = vmatprep.subr.mxu0 0.0
    %813 = vmatpush2.msra.mxu0 0.0
    %814 = vmatprep.subr.mxu0 0.0
    %815 = vmatpush2.msra.mxu0 0.0
    %816 = vmatprep.subr.mxu0 0.0
    %817 = vmatpush2.msra.mxu0 0.0
    %818 = vmatprep.subr.mxu0 0.0
    %819 = vmatpush2.msra.mxu0 0.0
    %820 = vmatprep.subr.mxu0 0.0
    %821 = vmatpush2.msra.mxu0 0.0
    %822 = vmatprep.subr.mxu0 0.0
    %823 = vmatpush2.msra.mxu0 0.0
    %824 = vmatprep.subr.mxu0 0.0
    %825 = vmatpush2.msra.mxu0 0.0
    %826 = vmatprep.subr.mxu0 0.0
    %827 = vmatpush2.msra.mxu0 0.0
    %828 = vmatprep.mubr.f32.mxu0 0.0
    %v829 = vand.u32 %v639, 4294901760
    %830 = vmatmul.mubr.f32.gmra.mxu0 %v829
    %v831 = vpop.f32.mrf.mxu0
    %v832 = vadd.f32 %v721, %v831
    %v833 = vpop.f32.mrf.mxu0
    %834 = vdwg.mxu0
    %835 = vmatprep.subr.mxu0 0.0
    %836 = vmatpush1.msra.mxu0 0.0
    %837 = vmatprep.subr.mxu0 0.0
    %838 = vmatpush1.msra.mxu0 0.0
    %839 = vmatprep.subr.mxu0 0.0
    %840 = vmatpush1.msra.mxu0 0.0
    %841 = vmatprep.subr.mxu0 0.0
    %842 = vmatpush1.msra.mxu0 0.0
    %843 = vmatprep.subr.mxu0 0.0
    %844 = vmatpush1.msra.mxu0 0.0
    %845 = vmatprep.subr.mxu0 0.0
    %846 = vmatpush1.msra.mxu0 0.0
    %847 = vmatprep.subr.mxu0 0.0
    %848 = vmatpush1.msra.mxu0 0.0
    %849 = vmatprep.subr.mxu0 0.0
    %850 = vmatpush1.msra.mxu0 0.0
    %851 = vmatprep.subr.mxu0 0.0
    %v852 = vand.u32 %v629, 4294901760
    %v853 = vsub.f32 %v629, %v852
    %854 = vmatpush1.msra.mxu0 %v853
    %855 = vmatprep.subr.mxu0 0.0
    %v856 = vand.u32 %v628, 4294901760
    %v857 = vsub.f32 %v628, %v856
    %858 = vmatpush1.msra.mxu0 %v857
    %859 = vmatprep.subr.mxu0 0.0
    %v860 = vand.u32 %v627, 4294901760
    %v861 = vsub.f32 %v627, %v860
    %862 = vmatpush1.msra.mxu0 %v861
    %863 = vmatprep.subr.mxu0 0.0
    %v864 = vand.u32 %v626, 4294901760
    %v865 = vsub.f32 %v626, %v864
    %866 = vmatpush1.msra.mxu0 %v865
    %867 = vmatprep.subr.mxu0 0.0
    %v868 = vand.u32 %v625, 4294901760
    %v869 = vsub.f32 %v625, %v868
    %870 = vmatpush1.msra.mxu0 %v869
    %871 = vmatprep.subr.mxu0 0.0
    %v872 = vand.u32 %v624, 4294901760
    %v873 = vsub.f32 %v624, %v872
    %874 = vmatpush1.msra.mxu0 %v873
    %875 = vmatprep.subr.mxu0 0.0
    %v876 = vand.u32 %v623, 4294901760
    %v877 = vsub.f32 %v623, %v876
    %878 = vmatpush1.msra.mxu0 %v877
    %879 = vmatprep.subr.mxu0 0.0
    %v880 = vand.u32 %v622, 4294901760
    %v881 = vsub.f32 %v622, %v880
    %882 = vmatpush1.msra.mxu0 %v881
    %883 = vmatprep.subr.mxu0 0.0
    %884 = vmatpush2.msra.mxu0 0.0
    %885 = vmatprep.subr.mxu0 0.0
    %886 = vmatpush2.msra.mxu0 0.0
    %887 = vmatprep.subr.mxu0 0.0
    %888 = vmatpush2.msra.mxu0 0.0
    %889 = vmatprep.subr.mxu0 0.0
    %890 = vmatpush2.msra.mxu0 0.0
    %891 = vmatprep.subr.mxu0 0.0
    %892 = vmatpush2.msra.mxu0 0.0
    %893 = vmatprep.subr.mxu0 0.0
    %894 = vmatpush2.msra.mxu0 0.0
    %895 = vmatprep.subr.mxu0 0.0
    %896 = vmatpush2.msra.mxu0 0.0
    %897 = vmatprep.subr.mxu0 0.0
    %898 = vmatpush2.msra.mxu0 0.0
    %899 = vmatprep.subr.mxu0 0.0
    %900 = vmatpush2.msra.mxu0 0.0
    %901 = vmatprep.subr.mxu0 0.0
    %902 = vmatpush2.msra.mxu0 0.0
    %903 = vmatprep.subr.mxu0 0.0
    %904 = vmatpush2.msra.mxu0 0.0
    %905 = vmatprep.subr.mxu0 0.0
    %906 = vmatpush2.msra.mxu0 0.0
    %907 = vmatprep.subr.mxu0 0.0
    %908 = vmatpush2.msra.mxu0 0.0
    %909 = vmatprep.subr.mxu0 0.0
    %910 = vmatpush2.msra.mxu0 0.0
    %911 = vmatprep.subr.mxu0 0.0
    %912 = vmatpush2.msra.mxu0 0.0
    %913 = vmatprep.subr.mxu0 0.0
    %914 = vmatpush2.msra.mxu0 0.0
    %915 = vmatprep.mubr.f32.mxu0 0.0
    %v916 = vand.u32 %v639, 4294901760
    %v917 = vsub.f32 %v639, %v916
    %918 = vmatmul.mubr.f32.gmra.mxu0 %v917
    %v919 = vpop.f32.mrf.mxu0
    %v920 = vadd.f32 %v832, %v919
    %v921 = vpop.f32.mrf.mxu0
    %922 = vdwg.mxu0
    %923 = vmatprep.subr.mxu0 0.0
    %924 = vmatpush1.msra.mxu0 0.0
    %925 = vmatprep.subr.mxu0 0.0
    %926 = vmatpush1.msra.mxu0 0.0
    %927 = vmatprep.subr.mxu0 0.0
    %928 = vmatpush1.msra.mxu0 0.0
    %929 = vmatprep.subr.mxu0 0.0
    %930 = vmatpush1.msra.mxu0 0.0
    %931 = vmatprep.subr.mxu0 0.0
    %932 = vmatpush1.msra.mxu0 0.0
    %933 = vmatprep.subr.mxu0 0.0
    %934 = vmatpush1.msra.mxu0 0.0
    %935 = vmatprep.subr.mxu0 0.0
    %936 = vmatpush1.msra.mxu0 0.0
    %937 = vmatprep.subr.mxu0 0.0
    %938 = vmatpush1.msra.mxu0 0.0
    %939 = vmatprep.subr.mxu0 0.0
    %v940 = vand.u32 %v629, 4294901760
    %941 = vmatpush1.msra.mxu0 %v940
    %942 = vmatprep.subr.mxu0 0.0
    %v943 = vand.u32 %v628, 4294901760
    %944 = vmatpush1.msra.mxu0 %v943
    %945 = vmatprep.subr.mxu0 0.0
    %v946 = vand.u32 %v627, 4294901760
    %947 = vmatpush1.msra.mxu0 %v946
    %948 = vmatprep.subr.mxu0 0.0
    %v949 = vand.u32 %v626, 4294901760
    %950 = vmatpush1.msra.mxu0 %v949
    %951 = vmatprep.subr.mxu0 0.0
    %v952 = vand.u32 %v625, 4294901760
    %953 = vmatpush1.msra.mxu0 %v952
    %954 = vmatprep.subr.mxu0 0.0
    %v955 = vand.u32 %v624, 4294901760
    %956 = vmatpush1.msra.mxu0 %v955
    %957 = vmatprep.subr.mxu0 0.0
    %v958 = vand.u32 %v623, 4294901760
    %959 = vmatpush1.msra.mxu0 %v958
    %960 = vmatprep.subr.mxu0 0.0
    %v961 = vand.u32 %v622, 4294901760
    %962 = vmatpush1.msra.mxu0 %v961
    %963 = vmatprep.subr.mxu0 0.0
    %964 = vmatpush2.msra.mxu0 0.0
    %965 = vmatprep.subr.mxu0 0.0
    %966 = vmatpush2.msra.mxu0 0.0
    %967 = vmatprep.subr.mxu0 0.0
    %968 = vmatpush2.msra.mxu0 0.0
    %969 = vmatprep.subr.mxu0 0.0
    %970 = vmatpush2.msra.mxu0 0.0
    %971 = vmatprep.subr.mxu0 0.0
    %972 = vmatpush2.msra.mxu0 0.0
    %973 = vmatprep.subr.mxu0 0.0
    %974 = vmatpush2.msra.mxu0 0.0
    %975 = vmatprep.subr.mxu0 0.0
    %976 = vmatpush2.msra.mxu0 0.0
    %977 = vmatprep.subr.mxu0 0.0
    %978 = vmatpush2.msra.mxu0 0.0
    %979 = vmatprep.subr.mxu0 0.0
    %980 = vmatpush2.msra.mxu0 0.0
    %981 = vmatprep.subr.mxu0 0.0
    %982 = vmatpush2.msra.mxu0 0.0
    %983 = vmatprep.subr.mxu0 0.0
    %984 = vmatpush2.msra.mxu0 0.0
    %985 = vmatprep.subr.mxu0 0.0
    %986 = vmatpush2.msra.mxu0 0.0
    %987 = vmatprep.subr.mxu0 0.0
    %988 = vmatpush2.msra.mxu0 0.0
    %989 = vmatprep.subr.mxu0 0.0
    %990 = vmatpush2.msra.mxu0 0.0
    %991 = vmatprep.subr.mxu0 0.0
    %992 = vmatpush2.msra.mxu0 0.0
    %993 = vmatprep.subr.mxu0 0.0
    %994 = vmatpush2.msra.mxu0 0.0
    %995 = vmatprep.mubr.f32.mxu0 0.0
    %v996 = vand.u32 %v639, 4294901760
    %v997 = vsub.f32 %v639, %v996
    %v998 = vand.u32 %v997, 4294901760
    %999 = vmatmul.mubr.f32.gmra.mxu0 %v998
    %v1000 = vpop.f32.mrf.mxu0
    %v1001 = vadd.f32 %v920, %v1000
    %v1002 = vpop.f32.mrf.mxu0
    %1003 = vdwg.mxu0
    %1004 = vmatprep.subr.mxu0 0.0
    %1005 = vmatpush1.msra.mxu0 0.0
    %1006 = vmatprep.subr.mxu0 0.0
    %1007 = vmatpush1.msra.mxu0 0.0
    %1008 = vmatprep.subr.mxu0 0.0
    %1009 = vmatpush1.msra.mxu0 0.0
    %1010 = vmatprep.subr.mxu0 0.0
    %1011 = vmatpush1.msra.mxu0 0.0
    %1012 = vmatprep.subr.mxu0 0.0
    %1013 = vmatpush1.msra.mxu0 0.0
    %1014 = vmatprep.subr.mxu0 0.0
    %1015 = vmatpush1.msra.mxu0 0.0
    %1016 = vmatprep.subr.mxu0 0.0
    %1017 = vmatpush1.msra.mxu0 0.0
    %1018 = vmatprep.subr.mxu0 0.0
    %1019 = vmatpush1.msra.mxu0 0.0
    %1020 = vmatprep.subr.mxu0 0.0
    %v1021 = vand.u32 %v629, 4294901760
    %v1022 = vsub.f32 %v629, %v1021
    %v1023 = vand.u32 %v1022, 4294901760
    %1024 = vmatpush1.msra.mxu0 %v1023
    %1025 = vmatprep.subr.mxu0 0.0
    %v1026 = vand.u32 %v628, 4294901760
    %v1027 = vsub.f32 %v628, %v1026
    %v1028 = vand.u32 %v1027, 4294901760
    %1029 = vmatpush1.msra.mxu0 %v1028
    %1030 = vmatprep.subr.mxu0 0.0
    %v1031 = vand.u32 %v627, 4294901760
    %v1032 = vsub.f32 %v627, %v1031
    %v1033 = vand.u32 %v1032, 4294901760
    %1034 = vmatpush1.msra.mxu0 %v1033
    %1035 = vmatprep.subr.mxu0 0.0
    %v1036 = vand.u32 %v626, 4294901760
    %v1037 = vsub.f32 %v626, %v1036
    %v1038 = vand.u32 %v1037, 4294901760
    %1039 = vmatpush1.msra.mxu0 %v1038
    %1040 = vmatprep.subr.mxu0 0.0
    %v1041 = vand.u32 %v625, 4294901760
    %v1042 = vsub.f32 %v625, %v1041
    %v1043 = vand.u32 %v1042, 4294901760
    %1044 = vmatpush1.msra.mxu0 %v1043
    %1045 = vmatprep.subr.mxu0 0.0
    %v1046 = vand.u32 %v624, 4294901760
    %v1047 = vsub.f32 %v624, %v1046
    %v1048 = vand.u32 %v1047, 4294901760
    %1049 = vmatpush1.msra.mxu0 %v1048
    %1050 = vmatprep.subr.mxu0 0.0
    %v1051 = vand.u32 %v623, 4294901760
    %v1052 = vsub.f32 %v623, %v1051
    %v1053 = vand.u32 %v1052, 4294901760
    %1054 = vmatpush1.msra.mxu0 %v1053
    %1055 = vmatprep.subr.mxu0 0.0
    %v1056 = vand.u32 %v622, 4294901760
    %v1057 = vsub.f32 %v622, %v1056
    %v1058 = vand.u32 %v1057, 4294901760
    %1059 = vmatpush1.msra.mxu0 %v1058
    %1060 = vmatprep.subr.mxu0 0.0
    %1061 = vmatpush2.msra.mxu0 0.0
    %1062 = vmatprep.subr.mxu0 0.0
    %1063 = vmatpush2.msra.mxu0 0.0
    %1064 = vmatprep.subr.mxu0 0.0
    %1065 = vmatpush2.msra.mxu0 0.0
    %1066 = vmatprep.subr.mxu0 0.0
    %1067 = vmatpush2.msra.mxu0 0.0
    %1068 = vmatprep.subr.mxu0 0.0
    %1069 = vmatpush2.msra.mxu0 0.0
    %1070 = vmatprep.subr.mxu0 0.0
    %1071 = vmatpush2.msra.mxu0 0.0
    %1072 = vmatprep.subr.mxu0 0.0
    %1073 = vmatpush2.msra.mxu0 0.0
    %1074 = vmatprep.subr.mxu0 0.0
    %1075 = vmatpush2.msra.mxu0 0.0
    %1076 = vmatprep.subr.mxu0 0.0
    %1077 = vmatpush2.msra.mxu0 0.0
    %1078 = vmatprep.subr.mxu0 0.0
    %1079 = vmatpush2.msra.mxu0 0.0
    %1080 = vmatprep.subr.mxu0 0.0
    %1081 = vmatpush2.msra.mxu0 0.0
    %1082 = vmatprep.subr.mxu0 0.0
    %1083 = vmatpush2.msra.mxu0 0.0
    %1084 = vmatprep.subr.mxu0 0.0
    %1085 = vmatpush2.msra.mxu0 0.0
    %1086 = vmatprep.subr.mxu0 0.0
    %1087 = vmatpush2.msra.mxu0 0.0
    %1088 = vmatprep.subr.mxu0 0.0
    %1089 = vmatpush2.msra.mxu0 0.0
    %1090 = vmatprep.subr.mxu0 0.0
    %1091 = vmatpush2.msra.mxu0 0.0
    %1092 = vmatprep.mubr.f32.mxu0 0.0
    %v1093 = vand.u32 %v639, 4294901760
    %1094 = vmatmul.mubr.f32.gmra.mxu0 %v1093
    %v1095 = vpop.f32.mrf.mxu0
    %v1096 = vadd.f32 %v1001, %v1095
    %v1097 = vpop.f32.mrf.mxu0
    %1098 = vdwg.mxu0
    %1099 = vmatprep.subr.mxu0 0.0
    %1100 = vmatpush1.msra.mxu0 0.0
    %1101 = vmatprep.subr.mxu0 0.0
    %1102 = vmatpush1.msra.mxu0 0.0
    %1103 = vmatprep.subr.mxu0 0.0
    %1104 = vmatpush1.msra.mxu0 0.0
    %1105 = vmatprep.subr.mxu0 0.0
    %1106 = vmatpush1.msra.mxu0 0.0
    %1107 = vmatprep.subr.mxu0 0.0
    %1108 = vmatpush1.msra.mxu0 0.0
    %1109 = vmatprep.subr.mxu0 0.0
    %1110 = vmatpush1.msra.mxu0 0.0
    %1111 = vmatprep.subr.mxu0 0.0
    %1112 = vmatpush1.msra.mxu0 0.0
    %1113 = vmatprep.subr.mxu0 0.0
    %1114 = vmatpush1.msra.mxu0 0.0
    %1115 = vmatprep.subr.mxu0 0.0
    %v1116 = vand.u32 %v629, 4294901760
    %1117 = vmatpush1.msra.mxu0 %v1116
    %1118 = vmatprep.subr.mxu0 0.0
    %v1119 = vand.u32 %v628, 4294901760
    %1120 = vmatpush1.msra.mxu0 %v1119
    %1121 = vmatprep.subr.mxu0 0.0
    %v1122 = vand.u32 %v627, 4294901760
    %1123 = vmatpush1.msra.mxu0 %v1122
    %1124 = vmatprep.subr.mxu0 0.0
    %v1125 = vand.u32 %v626, 4294901760
    %1126 = vmatpush1.msra.mxu0 %v1125
    %1127 = vmatprep.subr.mxu0 0.0
    %v1128 = vand.u32 %v625, 4294901760
    %1129 = vmatpush1.msra.mxu0 %v1128
    %1130 = vmatprep.subr.mxu0 0.0
    %v1131 = vand.u32 %v624, 4294901760
    %1132 = vmatpush1.msra.mxu0 %v1131
    %1133 = vmatprep.subr.mxu0 0.0
    %v1134 = vand.u32 %v623, 4294901760
    %1135 = vmatpush1.msra.mxu0 %v1134
    %1136 = vmatprep.subr.mxu0 0.0
    %v1137 = vand.u32 %v622, 4294901760
    %1138 = vmatpush1.msra.mxu0 %v1137
    %1139 = vmatprep.subr.mxu0 0.0
    %1140 = vmatpush2.msra.mxu0 0.0
    %1141 = vmatprep.subr.mxu0 0.0
    %1142 = vmatpush2.msra.mxu0 0.0
    %1143 = vmatprep.subr.mxu0 0.0
    %1144 = vmatpush2.msra.mxu0 0.0
    %1145 = vmatprep.subr.mxu0 0.0
    %1146 = vmatpush2.msra.mxu0 0.0
    %1147 = vmatprep.subr.mxu0 0.0
    %1148 = vmatpush2.msra.mxu0 0.0
    %1149 = vmatprep.subr.mxu0 0.0
    %1150 = vmatpush2.msra.mxu0 0.0
    %1151 = vmatprep.subr.mxu0 0.0
    %1152 = vmatpush2.msra.mxu0 0.0
    %1153 = vmatprep.subr.mxu0 0.0
    %1154 = vmatpush2.msra.mxu0 0.0
    %1155 = vmatprep.subr.mxu0 0.0
    %1156 = vmatpush2.msra.mxu0 0.0
    %1157 = vmatprep.subr.mxu0 0.0
    %1158 = vmatpush2.msra.mxu0 0.0
    %1159 = vmatprep.subr.mxu0 0.0
    %1160 = vmatpush2.msra.mxu0 0.0
    %1161 = vmatprep.subr.mxu0 0.0
    %1162 = vmatpush2.msra.mxu0 0.0
    %1163 = vmatprep.subr.mxu0 0.0
    %1164 = vmatpush2.msra.mxu0 0.0
    %1165 = vmatprep.subr.mxu0 0.0
    %1166 = vmatpush2.msra.mxu0 0.0
    %1167 = vmatprep.subr.mxu0 0.0
    %1168 = vmatpush2.msra.mxu0 0.0
    %1169 = vmatprep.subr.mxu0 0.0
    %1170 = vmatpush2.msra.mxu0 0.0
    %1171 = vmatprep.mubr.f32.mxu0 0.0
    %v1172 = vand.u32 %v639, 4294901760
    %1173 = vmatmul.mubr.f32.gmra.mxu0 %v1172
    %v1174 = vpop.f32.mrf.mxu0
    %v1175 = vadd.f32 %v1096, %v1174
    %v1176 = vpop.f32.mrf.mxu0
    %1177 = vdwg.mxu0
    %v1178 = vld [vmem:[%s6] sm:$0xff]
    %v1179 = vld [vmem:[%s6 + $0x8] sm:$0xff]
    %v1180 = vld [vmem:[%s6 + $0x10] sm:$0xff]
    %v1181 = vld [vmem:[%s6 + $0x18] sm:$0xff]
    %v1182 = vld [vmem:[%s6 + $0x20] sm:$0xff]
    %v1183 = vld [vmem:[%s6 + $0x28] sm:$0xff]
    %v1184 = vld [vmem:[%s6 + $0x30] sm:$0xff]
    %v1185 = vld [vmem:[%s6 + $0x38] sm:$0xff]
    %v1186 = vld [vmem:[%s7] sm:$0x1]
    %v1188 = vlaneseq
    %v1189 = vshrl.u32 %v1188, 7
    %v1190 = vsub.s32 0, %v1189
    %v1191 = vrot.slane %v1186, %v1190
    %1193 = vmatprep.subr.mxu0 0.0
    %1194 = vmatpush1.msra.mxu0 0.0
    %1195 = vmatprep.subr.mxu0 0.0
    %1196 = vmatpush1.msra.mxu0 0.0
    %1197 = vmatprep.subr.mxu0 0.0
    %1198 = vmatpush1.msra.mxu0 0.0
    %1199 = vmatprep.subr.mxu0 0.0
    %1200 = vmatpush1.msra.mxu0 0.0
    %1201 = vmatprep.subr.mxu0 0.0
    %1202 = vmatpush1.msra.mxu0 0.0
    %1203 = vmatprep.subr.mxu0 0.0
    %1204 = vmatpush1.msra.mxu0 0.0
    %1205 = vmatprep.subr.mxu0 0.0
    %1206 = vmatpush1.msra.mxu0 0.0
    %1207 = vmatprep.subr.mxu0 0.0
    %1208 = vmatpush1.msra.mxu0 0.0
    %1209 = vmatprep.subr.mxu0 0.0
    %v1210 = vand.u32 %v1185, 4294901760
    %1211 = vmatpush1.msra.mxu0 %v1210
    %1212 = vmatprep.subr.mxu0 0.0
    %v1213 = vand.u32 %v1184, 4294901760
    %1214 = vmatpush1.msra.mxu0 %v1213
    %1215 = vmatprep.subr.mxu0 0.0
    %v1216 = vand.u32 %v1183, 4294901760
    %1217 = vmatpush1.msra.mxu0 %v1216
    %1218 = vmatprep.subr.mxu0 0.0
    %v1219 = vand.u32 %v1182, 4294901760
    %1220 = vmatpush1.msra.mxu0 %v1219
    %1221 = vmatprep.subr.mxu0 0.0
    %v1222 = vand.u32 %v1181, 4294901760
    %1223 = vmatpush1.msra.mxu0 %v1222
    %1224 = vmatprep.subr.mxu0 0.0
    %v1225 = vand.u32 %v1180, 4294901760
    %1226 = vmatpush1.msra.mxu0 %v1225
    %1227 = vmatprep.subr.mxu0 0.0
    %v1228 = vand.u32 %v1179, 4294901760
    %1229 = vmatpush1.msra.mxu0 %v1228
    %1230 = vmatprep.subr.mxu0 0.0
    %v1231 = vand.u32 %v1178, 4294901760
    %1232 = vmatpush1.msra.mxu0 %v1231
    %1233 = vmatprep.subr.mxu0 0.0
    %1234 = vmatpush2.msra.mxu0 0.0
    %1235 = vmatprep.subr.mxu0 0.0
    %1236 = vmatpush2.msra.mxu0 0.0
    %1237 = vmatprep.subr.mxu0 0.0
    %1238 = vmatpush2.msra.mxu0 0.0
    %1239 = vmatprep.subr.mxu0 0.0
    %1240 = vmatpush2.msra.mxu0 0.0
    %1241 = vmatprep.subr.mxu0 0.0
    %1242 = vmatpush2.msra.mxu0 0.0
    %1243 = vmatprep.subr.mxu0 0.0
    %1244 = vmatpush2.msra.mxu0 0.0
    %1245 = vmatprep.subr.mxu0 0.0
    %1246 = vmatpush2.msra.mxu0 0.0
    %1247 = vmatprep.subr.mxu0 0.0
    %1248 = vmatpush2.msra.mxu0 0.0
    %1249 = vmatprep.subr.mxu0 0.0
    %1250 = vmatpush2.msra.mxu0 0.0
    %1251 = vmatprep.subr.mxu0 0.0
    %1252 = vmatpush2.msra.mxu0 0.0
    %1253 = vmatprep.subr.mxu0 0.0
    %1254 = vmatpush2.msra.mxu0 0.0
    %1255 = vmatprep.subr.mxu0 0.0
    %1256 = vmatpush2.msra.mxu0 0.0
    %1257 = vmatprep.subr.mxu0 0.0
    %1258 = vmatpush2.msra.mxu0 0.0
    %1259 = vmatprep.subr.mxu0 0.0
    %1260 = vmatpush2.msra.mxu0 0.0
    %1261 = vmatprep.subr.mxu0 0.0
    %1262 = vmatpush2.msra.mxu0 0.0
    %1263 = vmatprep.subr.mxu0 0.0
    %1264 = vmatpush2.msra.mxu0 0.0
    %1265 = vmatprep.mubr.f32.mxu0 0.0
    %v1266 = vand.u32 %v639, 4294901760
    %v1267 = vsub.f32 %v639, %v1266
    %v1268 = vand.u32 %v1267, 4294901760
    %v1269 = vsub.f32 %v1267, %v1268
    %v1270 = vand.u32 %v1269, 4294901760
    %1271 = vmatmul.mubr.f32.gmra.mxu0 %v1270
    %v1272 = vpop.f32.mrf.mxu0
    %v1273 = vadd.f32 %v1191, %v1272
    %v1274 = vpop.f32.mrf.mxu0
    %1275 = vdwg.mxu0
    %1276 = vmatprep.subr.mxu0 0.0
    %1277 = vmatpush1.msra.mxu0 0.0
    %1278 = vmatprep.subr.mxu0 0.0
    %1279 = vmatpush1.msra.mxu0 0.0
    %1280 = vmatprep.subr.mxu0 0.0
    %1281 = vmatpush1.msra.mxu0 0.0
    %1282 = vmatprep.subr.mxu0 0.0
    %1283 = vmatpush1.msra.mxu0 0.0
    %1284 = vmatprep.subr.mxu0 0.0
    %1285 = vmatpush1.msra.mxu0 0.0
    %1286 = vmatprep.subr.mxu0 0.0
    %1287 = vmatpush1.msra.mxu0 0.0
    %1288 = vmatprep.subr.mxu0 0.0
    %1289 = vmatpush1.msra.mxu0 0.0
    %1290 = vmatprep.subr.mxu0 0.0
    %1291 = vmatpush1.msra.mxu0 0.0
    %1292 = vmatprep.subr.mxu0 0.0
    %v1293 = vand.u32 %v1185, 4294901760
    %v1294 = vsub.f32 %v1185, %v1293
    %v1295 = vand.u32 %v1294, 4294901760
    %v1296 = vsub.f32 %v1294, %v1295
    %v1297 = vand.u32 %v1296, 4294901760
    %1298 = vmatpush1.msra.mxu0 %v1297
    %1299 = vmatprep.subr.mxu0 0.0
    %v1300 = vand.u32 %v1184, 4294901760
    %v1301 = vsub.f32 %v1184, %v1300
    %v1302 = vand.u32 %v1301, 4294901760
    %v1303 = vsub.f32 %v1301, %v1302
    %v1304 = vand.u32 %v1303, 4294901760
    %1305 = vmatpush1.msra.mxu0 %v1304
    %1306 = vmatprep.subr.mxu0 0.0
    %v1307 = vand.u32 %v1183, 4294901760
    %v1308 = vsub.f32 %v1183, %v1307
    %v1309 = vand.u32 %v1308, 4294901760
    %v1310 = vsub.f32 %v1308, %v1309
    %v1311 = vand.u32 %v1310, 4294901760
    %1312 = vmatpush1.msra.mxu0 %v1311
    %1313 = vmatprep.subr.mxu0 0.0
    %v1314 = vand.u32 %v1182, 4294901760
    %v1315 = vsub.f32 %v1182, %v1314
    %v1316 = vand.u32 %v1315, 4294901760
    %v1317 = vsub.f32 %v1315, %v1316
    %v1318 = vand.u32 %v1317, 4294901760
    %1319 = vmatpush1.msra.mxu0 %v1318
    %1320 = vmatprep.subr.mxu0 0.0
    %v1321 = vand.u32 %v1181, 4294901760
    %v1322 = vsub.f32 %v1181, %v1321
    %v1323 = vand.u32 %v1322, 4294901760
    %v1324 = vsub.f32 %v1322, %v1323
    %v1325 = vand.u32 %v1324, 4294901760
    %1326 = vmatpush1.msra.mxu0 %v1325
    %1327 = vmatprep.subr.mxu0 0.0
    %v1328 = vand.u32 %v1180, 4294901760
    %v1329 = vsub.f32 %v1180, %v1328
    %v1330 = vand.u32 %v1329, 4294901760
    %v1331 = vsub.f32 %v1329, %v1330
    %v1332 = vand.u32 %v1331, 4294901760
    %1333 = vmatpush1.msra.mxu0 %v1332
    %1334 = vmatprep.subr.mxu0 0.0
    %v1335 = vand.u32 %v1179, 4294901760
    %v1336 = vsub.f32 %v1179, %v1335
    %v1337 = vand.u32 %v1336, 4294901760
    %v1338 = vsub.f32 %v1336, %v1337
    %v1339 = vand.u32 %v1338, 4294901760
    %1340 = vmatpush1.msra.mxu0 %v1339
    %1341 = vmatprep.subr.mxu0 0.0
    %v1342 = vand.u32 %v1178, 4294901760
    %v1343 = vsub.f32 %v1178, %v1342
    %v1344 = vand.u32 %v1343, 4294901760
    %v1345 = vsub.f32 %v1343, %v1344
    %v1346 = vand.u32 %v1345, 4294901760
    %1347 = vmatpush1.msra.mxu0 %v1346
    %1348 = vmatprep.subr.mxu0 0.0
    %1349 = vmatpush2.msra.mxu0 0.0
    %1350 = vmatprep.subr.mxu0 0.0
    %1351 = vmatpush2.msra.mxu0 0.0
    %1352 = vmatprep.subr.mxu0 0.0
    %1353 = vmatpush2.msra.mxu0 0.0
    %1354 = vmatprep.subr.mxu0 0.0
    %1355 = vmatpush2.msra.mxu0 0.0
    %1356 = vmatprep.subr.mxu0 0.0
    %1357 = vmatpush2.msra.mxu0 0.0
    %1358 = vmatprep.subr.mxu0 0.0
    %1359 = vmatpush2.msra.mxu0 0.0
    %1360 = vmatprep.subr.mxu0 0.0
    %1361 = vmatpush2.msra.mxu0 0.0
    %1362 = vmatprep.subr.mxu0 0.0
    %1363 = vmatpush2.msra.mxu0 0.0
    %1364 = vmatprep.subr.mxu0 0.0
    %1365 = vmatpush2.msra.mxu0 0.0
    %1366 = vmatprep.subr.mxu0 0.0
    %1367 = vmatpush2.msra.mxu0 0.0
    %1368 = vmatprep.subr.mxu0 0.0
    %1369 = vmatpush2.msra.mxu0 0.0
    %1370 = vmatprep.subr.mxu0 0.0
    %1371 = vmatpush2.msra.mxu0 0.0
    %1372 = vmatprep.subr.mxu0 0.0
    %1373 = vmatpush2.msra.mxu0 0.0
    %1374 = vmatprep.subr.mxu0 0.0
    %1375 = vmatpush2.msra.mxu0 0.0
    %1376 = vmatprep.subr.mxu0 0.0
    %1377 = vmatpush2.msra.mxu0 0.0
    %1378 = vmatprep.subr.mxu0 0.0
    %1379 = vmatpush2.msra.mxu0 0.0
    %1380 = vmatprep.mubr.f32.mxu0 0.0
    %v1381 = vand.u32 %v639, 4294901760
    %1382 = vmatmul.mubr.f32.gmra.mxu0 %v1381
    %v1383 = vpop.f32.mrf.mxu0
    %v1384 = vadd.f32 %v1273, %v1383
    %v1385 = vpop.f32.mrf.mxu0
    %1386 = vdwg.mxu0
    %1387 = vmatprep.subr.mxu0 0.0
    %1388 = vmatpush1.msra.mxu0 0.0
    %1389 = vmatprep.subr.mxu0 0.0
    %1390 = vmatpush1.msra.mxu0 0.0
    %1391 = vmatprep.subr.mxu0 0.0
    %1392 = vmatpush1.msra.mxu0 0.0
    %1393 = vmatprep.subr.mxu0 0.0
    %1394 = vmatpush1.msra.mxu0 0.0
    %1395 = vmatprep.subr.mxu0 0.0
    %1396 = vmatpush1.msra.mxu0 0.0
    %1397 = vmatprep.subr.mxu0 0.0
    %1398 = vmatpush1.msra.mxu0 0.0
    %1399 = vmatprep.subr.mxu0 0.0
    %1400 = vmatpush1.msra.mxu0 0.0
    %1401 = vmatprep.subr.mxu0 0.0
    %1402 = vmatpush1.msra.mxu0 0.0
    %1403 = vmatprep.subr.mxu0 0.0
    %v1404 = vand.u32 %v1185, 4294901760
    %v1405 = vsub.f32 %v1185, %v1404
    %1406 = vmatpush1.msra.mxu0 %v1405
    %1407 = vmatprep.subr.mxu0 0.0
    %v1408 = vand.u32 %v1184, 4294901760
    %v1409 = vsub.f32 %v1184, %v1408
    %1410 = vmatpush1.msra.mxu0 %v1409
    %1411 = vmatprep.subr.mxu0 0.0
    %v1412 = vand.u32 %v1183, 4294901760
    %v1413 = vsub.f32 %v1183, %v1412
    %1414 = vmatpush1.msra.mxu0 %v1413
    %1415 = vmatprep.subr.mxu0 0.0
    %v1416 = vand.u32 %v1182, 4294901760
    %v1417 = vsub.f32 %v1182, %v1416
    %1418 = vmatpush1.msra.mxu0 %v1417
    %1419 = vmatprep.subr.mxu0 0.0
    %v1420 = vand.u32 %v1181, 4294901760
    %v1421 = vsub.f32 %v1181, %v1420
    %1422 = vmatpush1.msra.mxu0 %v1421
    %1423 = vmatprep.subr.mxu0 0.0
    %v1424 = vand.u32 %v1180, 4294901760
    %v1425 = vsub.f32 %v1180, %v1424
    %1426 = vmatpush1.msra.mxu0 %v1425
    %1427 = vmatprep.subr.mxu0 0.0
    %v1428 = vand.u32 %v1179, 4294901760
    %v1429 = vsub.f32 %v1179, %v1428
    %1430 = vmatpush1.msra.mxu0 %v1429
    %1431 = vmatprep.subr.mxu0 0.0
    %v1432 = vand.u32 %v1178, 4294901760
    %v1433 = vsub.f32 %v1178, %v1432
    %1434 = vmatpush1.msra.mxu0 %v1433
    %1435 = vmatprep.subr.mxu0 0.0
    %1436 = vmatpush2.msra.mxu0 0.0
    %1437 = vmatprep.subr.mxu0 0.0
    %1438 = vmatpush2.msra.mxu0 0.0
    %1439 = vmatprep.subr.mxu0 0.0
    %1440 = vmatpush2.msra.mxu0 0.0
    %1441 = vmatprep.subr.mxu0 0.0
    %1442 = vmatpush2.msra.mxu0 0.0
    %1443 = vmatprep.subr.mxu0 0.0
    %1444 = vmatpush2.msra.mxu0 0.0
    %1445 = vmatprep.subr.mxu0 0.0
    %1446 = vmatpush2.msra.mxu0 0.0
    %1447 = vmatprep.subr.mxu0 0.0
    %1448 = vmatpush2.msra.mxu0 0.0
    %1449 = vmatprep.subr.mxu0 0.0
    %1450 = vmatpush2.msra.mxu0 0.0
    %1451 = vmatprep.subr.mxu0 0.0
    %1452 = vmatpush2.msra.mxu0 0.0
    %1453 = vmatprep.subr.mxu0 0.0
    %1454 = vmatpush2.msra.mxu0 0.0
    %1455 = vmatprep.subr.mxu0 0.0
    %1456 = vmatpush2.msra.mxu0 0.0
    %1457 = vmatprep.subr.mxu0 0.0
    %1458 = vmatpush2.msra.mxu0 0.0
    %1459 = vmatprep.subr.mxu0 0.0
    %1460 = vmatpush2.msra.mxu0 0.0
    %1461 = vmatprep.subr.mxu0 0.0
    %1462 = vmatpush2.msra.mxu0 0.0
    %1463 = vmatprep.subr.mxu0 0.0
    %1464 = vmatpush2.msra.mxu0 0.0
    %1465 = vmatprep.subr.mxu0 0.0
    %1466 = vmatpush2.msra.mxu0 0.0
    %1467 = vmatprep.mubr.f32.mxu0 0.0
    %v1468 = vand.u32 %v639, 4294901760
    %v1469 = vsub.f32 %v639, %v1468
    %1470 = vmatmul.mubr.f32.gmra.mxu0 %v1469
    %v1471 = vpop.f32.mrf.mxu0
    %v1472 = vadd.f32 %v1384, %v1471
    %v1473 = vpop.f32.mrf.mxu0
    %1474 = vdwg.mxu0
    %1475 = vmatprep.subr.mxu0 0.0
    %1476 = vmatpush1.msra.mxu0 0.0
    %1477 = vmatprep.subr.mxu0 0.0
    %1478 = vmatpush1.msra.mxu0 0.0
    %1479 = vmatprep.subr.mxu0 0.0
    %1480 = vmatpush1.msra.mxu0 0.0
    %1481 = vmatprep.subr.mxu0 0.0
    %1482 = vmatpush1.msra.mxu0 0.0
    %1483 = vmatprep.subr.mxu0 0.0
    %1484 = vmatpush1.msra.mxu0 0.0
    %1485 = vmatprep.subr.mxu0 0.0
    %1486 = vmatpush1.msra.mxu0 0.0
    %1487 = vmatprep.subr.mxu0 0.0
    %1488 = vmatpush1.msra.mxu0 0.0
    %1489 = vmatprep.subr.mxu0 0.0
    %1490 = vmatpush1.msra.mxu0 0.0
    %1491 = vmatprep.subr.mxu0 0.0
    %v1492 = vand.u32 %v1185, 4294901760
    %1493 = vmatpush1.msra.mxu0 %v1492
    %1494 = vmatprep.subr.mxu0 0.0
    %v1495 = vand.u32 %v1184, 4294901760
    %1496 = vmatpush1.msra.mxu0 %v1495
    %1497 = vmatprep.subr.mxu0 0.0
    %v1498 = vand.u32 %v1183, 4294901760
    %1499 = vmatpush1.msra.mxu0 %v1498
    %1500 = vmatprep.subr.mxu0 0.0
    %v1501 = vand.u32 %v1182, 4294901760
    %1502 = vmatpush1.msra.mxu0 %v1501
    %1503 = vmatprep.subr.mxu0 0.0
    %v1504 = vand.u32 %v1181, 4294901760
    %1505 = vmatpush1.msra.mxu0 %v1504
    %1506 = vmatprep.subr.mxu0 0.0
    %v1507 = vand.u32 %v1180, 4294901760
    %1508 = vmatpush1.msra.mxu0 %v1507
    %1509 = vmatprep.subr.mxu0 0.0
    %v1510 = vand.u32 %v1179, 4294901760
    %1511 = vmatpush1.msra.mxu0 %v1510
    %1512 = vmatprep.subr.mxu0 0.0
    %v1513 = vand.u32 %v1178, 4294901760
    %1514 = vmatpush1.msra.mxu0 %v1513
    %1515 = vmatprep.subr.mxu0 0.0
    %1516 = vmatpush2.msra.mxu0 0.0
    %1517 = vmatprep.subr.mxu0 0.0
    %1518 = vmatpush2.msra.mxu0 0.0
    %1519 = vmatprep.subr.mxu0 0.0
    %1520 = vmatpush2.msra.mxu0 0.0
    %1521 = vmatprep.subr.mxu0 0.0
    %1522 = vmatpush2.msra.mxu0 0.0
    %1523 = vmatprep.subr.mxu0 0.0
    %1524 = vmatpush2.msra.mxu0 0.0
    %1525 = vmatprep.subr.mxu0 0.0
    %1526 = vmatpush2.msra.mxu0 0.0
    %1527 = vmatprep.subr.mxu0 0.0
    %1528 = vmatpush2.msra.mxu0 0.0
    %1529 = vmatprep.subr.mxu0 0.0
    %1530 = vmatpush2.msra.mxu0 0.0
    %1531 = vmatprep.subr.mxu0 0.0
    %1532 = vmatpush2.msra.mxu0 0.0
    %1533 = vmatprep.subr.mxu0 0.0
    %1534 = vmatpush2.msra.mxu0 0.0
    %1535 = vmatprep.subr.mxu0 0.0
    %1536 = vmatpush2.msra.mxu0 0.0
    %1537 = vmatprep.subr.mxu0 0.0
    %1538 = vmatpush2.msra.mxu0 0.0
    %1539 = vmatprep.subr.mxu0 0.0
    %1540 = vmatpush2.msra.mxu0 0.0
    %1541 = vmatprep.subr.mxu0 0.0
    %1542 = vmatpush2.msra.mxu0 0.0
    %1543 = vmatprep.subr.mxu0 0.0
    %1544 = vmatpush2.msra.mxu0 0.0
    %1545 = vmatprep.subr.mxu0 0.0
    %1546 = vmatpush2.msra.mxu0 0.0
    %1547 = vmatprep.mubr.f32.mxu0 0.0
    %v1548 = vand.u32 %v639, 4294901760
    %v1549 = vsub.f32 %v639, %v1548
    %v1550 = vand.u32 %v1549, 4294901760
    %1551 = vmatmul.mubr.f32.gmra.mxu0 %v1550
    %v1552 = vpop.f32.mrf.mxu0
    %v1553 = vadd.f32 %v1472, %v1552
    %v1554 = vpop.f32.mrf.mxu0
    %1555 = vdwg.mxu0
    %1556 = vmatprep.subr.mxu0 0.0
    %1557 = vmatpush1.msra.mxu0 0.0
    %1558 = vmatprep.subr.mxu0 0.0
    %1559 = vmatpush1.msra.mxu0 0.0
    %1560 = vmatprep.subr.mxu0 0.0
    %1561 = vmatpush1.msra.mxu0 0.0
    %1562 = vmatprep.subr.mxu0 0.0
    %1563 = vmatpush1.msra.mxu0 0.0
    %1564 = vmatprep.subr.mxu0 0.0
    %1565 = vmatpush1.msra.mxu0 0.0
    %1566 = vmatprep.subr.mxu0 0.0
    %1567 = vmatpush1.msra.mxu0 0.0
    %1568 = vmatprep.subr.mxu0 0.0
    %1569 = vmatpush1.msra.mxu0 0.0
    %1570 = vmatprep.subr.mxu0 0.0
    %1571 = vmatpush1.msra.mxu0 0.0
    %1572 = vmatprep.subr.mxu0 0.0
    %v1573 = vand.u32 %v1185, 4294901760
    %v1574 = vsub.f32 %v1185, %v1573
    %v1575 = vand.u32 %v1574, 4294901760
    %1576 = vmatpush1.msra.mxu0 %v1575
    %1577 = vmatprep.subr.mxu0 0.0
    %v1578 = vand.u32 %v1184, 4294901760
    %v1579 = vsub.f32 %v1184, %v1578
    %v1580 = vand.u32 %v1579, 4294901760
    %1581 = vmatpush1.msra.mxu0 %v1580
    %1582 = vmatprep.subr.mxu0 0.0
    %v1583 = vand.u32 %v1183, 4294901760
    %v1584 = vsub.f32 %v1183, %v1583
    %v1585 = vand.u32 %v1584, 4294901760
    %1586 = vmatpush1.msra.mxu0 %v1585
    %1587 = vmatprep.subr.mxu0 0.0
    %v1588 = vand.u32 %v1182, 4294901760
    %v1589 = vsub.f32 %v1182, %v1588
    %v1590 = vand.u32 %v1589, 4294901760
    %1591 = vmatpush1.msra.mxu0 %v1590
    %1592 = vmatprep.subr.mxu0 0.0
    %v1593 = vand.u32 %v1181, 4294901760
    %v1594 = vsub.f32 %v1181, %v1593
    %v1595 = vand.u32 %v1594, 4294901760
    %1596 = vmatpush1.msra.mxu0 %v1595
    %1597 = vmatprep.subr.mxu0 0.0
    %v1598 = vand.u32 %v1180, 4294901760
    %v1599 = vsub.f32 %v1180, %v1598
    %v1600 = vand.u32 %v1599, 4294901760
    %1601 = vmatpush1.msra.mxu0 %v1600
    %1602 = vmatprep.subr.mxu0 0.0
    %v1603 = vand.u32 %v1179, 4294901760
    %v1604 = vsub.f32 %v1179, %v1603
    %v1605 = vand.u32 %v1604, 4294901760
    %1606 = vmatpush1.msra.mxu0 %v1605
    %1607 = vmatprep.subr.mxu0 0.0
    %v1608 = vand.u32 %v1178, 4294901760
    %v1609 = vsub.f32 %v1178, %v1608
    %v1610 = vand.u32 %v1609, 4294901760
    %1611 = vmatpush1.msra.mxu0 %v1610
    %1612 = vmatprep.subr.mxu0 0.0
    %1613 = vmatpush2.msra.mxu0 0.0
    %1614 = vmatprep.subr.mxu0 0.0
    %1615 = vmatpush2.msra.mxu0 0.0
    %1616 = vmatprep.subr.mxu0 0.0
    %1617 = vmatpush2.msra.mxu0 0.0
    %1618 = vmatprep.subr.mxu0 0.0
    %1619 = vmatpush2.msra.mxu0 0.0
    %1620 = vmatprep.subr.mxu0 0.0
    %1621 = vmatpush2.msra.mxu0 0.0
    %1622 = vmatprep.subr.mxu0 0.0
    %1623 = vmatpush2.msra.mxu0 0.0
    %1624 = vmatprep.subr.mxu0 0.0
    %1625 = vmatpush2.msra.mxu0 0.0
    %1626 = vmatprep.subr.mxu0 0.0
    %1627 = vmatpush2.msra.mxu0 0.0
    %1628 = vmatprep.subr.mxu0 0.0
    %1629 = vmatpush2.msra.mxu0 0.0
    %1630 = vmatprep.subr.mxu0 0.0
    %1631 = vmatpush2.msra.mxu0 0.0
    %1632 = vmatprep.subr.mxu0 0.0
    %1633 = vmatpush2.msra.mxu0 0.0
    %1634 = vmatprep.subr.mxu0 0.0
    %1635 = vmatpush2.msra.mxu0 0.0
    %1636 = vmatprep.subr.mxu0 0.0
    %1637 = vmatpush2.msra.mxu0 0.0
    %1638 = vmatprep.subr.mxu0 0.0
    %1639 = vmatpush2.msra.mxu0 0.0
    %1640 = vmatprep.subr.mxu0 0.0
    %1641 = vmatpush2.msra.mxu0 0.0
    %1642 = vmatprep.subr.mxu0 0.0
    %1643 = vmatpush2.msra.mxu0 0.0
    %1644 = vmatprep.mubr.f32.mxu0 0.0
    %v1645 = vand.u32 %v639, 4294901760
    %1646 = vmatmul.mubr.f32.gmra.mxu0 %v1645
    %v1647 = vpop.f32.mrf.mxu0
    %v1648 = vadd.f32 %v1553, %v1647
    %v1649 = vpop.f32.mrf.mxu0
    %1650 = vdwg.mxu0
    %1651 = vmatprep.subr.mxu0 0.0
    %1652 = vmatpush1.msra.mxu0 0.0
    %1653 = vmatprep.subr.mxu0 0.0
    %1654 = vmatpush1.msra.mxu0 0.0
    %1655 = vmatprep.subr.mxu0 0.0
    %1656 = vmatpush1.msra.mxu0 0.0
    %1657 = vmatprep.subr.mxu0 0.0
    %1658 = vmatpush1.msra.mxu0 0.0
    %1659 = vmatprep.subr.mxu0 0.0
    %1660 = vmatpush1.msra.mxu0 0.0
    %1661 = vmatprep.subr.mxu0 0.0
    %1662 = vmatpush1.msra.mxu0 0.0
    %1663 = vmatprep.subr.mxu0 0.0
    %1664 = vmatpush1.msra.mxu0 0.0
    %1665 = vmatprep.subr.mxu0 0.0
    %1666 = vmatpush1.msra.mxu0 0.0
    %1667 = vmatprep.subr.mxu0 0.0
    %v1668 = vand.u32 %v1185, 4294901760
    %1669 = vmatpush1.msra.mxu0 %v1668
    %1670 = vmatprep.subr.mxu0 0.0
    %v1671 = vand.u32 %v1184, 4294901760
    %1672 = vmatpush1.msra.mxu0 %v1671
    %1673 = vmatprep.subr.mxu0 0.0
    %v1674 = vand.u32 %v1183, 4294901760
    %1675 = vmatpush1.msra.mxu0 %v1674
    %1676 = vmatprep.subr.mxu0 0.0
    %v1677 = vand.u32 %v1182, 4294901760
    %1678 = vmatpush1.msra.mxu0 %v1677
    %1679 = vmatprep.subr.mxu0 0.0
    %v1680 = vand.u32 %v1181, 4294901760
    %1681 = vmatpush1.msra.mxu0 %v1680
    %1682 = vmatprep.subr.mxu0 0.0
    %v1683 = vand.u32 %v1180, 4294901760
    %1684 = vmatpush1.msra.mxu0 %v1683
    %1685 = vmatprep.subr.mxu0 0.0
    %v1686 = vand.u32 %v1179, 4294901760
    %1687 = vmatpush1.msra.mxu0 %v1686
    %1688 = vmatprep.subr.mxu0 0.0
    %v1689 = vand.u32 %v1178, 4294901760
    %1690 = vmatpush1.msra.mxu0 %v1689
    %1691 = vmatprep.subr.mxu0 0.0
    %1692 = vmatpush2.msra.mxu0 0.0
    %1693 = vmatprep.subr.mxu0 0.0
    %1694 = vmatpush2.msra.mxu0 0.0
    %1695 = vmatprep.subr.mxu0 0.0
    %1696 = vmatpush2.msra.mxu0 0.0
    %1697 = vmatprep.subr.mxu0 0.0
    %1698 = vmatpush2.msra.mxu0 0.0
    %1699 = vmatprep.subr.mxu0 0.0
    %1700 = vmatpush2.msra.mxu0 0.0
    %1701 = vmatprep.subr.mxu0 0.0
    %1702 = vmatpush2.msra.mxu0 0.0
    %1703 = vmatprep.subr.mxu0 0.0
    %1704 = vmatpush2.msra.mxu0 0.0
    %1705 = vmatprep.subr.mxu0 0.0
    %1706 = vmatpush2.msra.mxu0 0.0
    %1707 = vmatprep.subr.mxu0 0.0
    %1708 = vmatpush2.msra.mxu0 0.0
    %1709 = vmatprep.subr.mxu0 0.0
    %1710 = vmatpush2.msra.mxu0 0.0
    %1711 = vmatprep.subr.mxu0 0.0
    %1712 = vmatpush2.msra.mxu0 0.0
    %1713 = vmatprep.subr.mxu0 0.0
    %1714 = vmatpush2.msra.mxu0 0.0
    %1715 = vmatprep.subr.mxu0 0.0
    %1716 = vmatpush2.msra.mxu0 0.0
    %1717 = vmatprep.subr.mxu0 0.0
    %1718 = vmatpush2.msra.mxu0 0.0
    %1719 = vmatprep.subr.mxu0 0.0
    %1720 = vmatpush2.msra.mxu0 0.0
    %1721 = vmatprep.subr.mxu0 0.0
    %1722 = vmatpush2.msra.mxu0 0.0
    %1723 = vmatprep.mubr.f32.mxu0 0.0
    %v1724 = vand.u32 %v639, 4294901760
    %1725 = vmatmul.mubr.f32.gmra.mxu0 %v1724
    %v1726 = vpop.f32.mrf.mxu0
    %v1727 = vadd.f32 %v1648, %v1726
    %v1728 = vpop.f32.mrf.mxu0
    %1729 = vdwg.mxu0
    %v1730 = vmul.f32 %v1727, 0.5
    %v1731 = vmul.f32 %v1730, 1.442695
    %v1732 = vpow.pop %v1731
    %v1733 = vld [vmem:[%s1] sm:$0xf]
    %v1734 = vmul.f32 %v1732, %v1733
    %v1735 = vadd.f32 %v1175, %v1734
    %v1736 = vld [vmem:[%s8] sm:$0xff]
    %v1737 = vld [vmem:[%s8 + $0x8] sm:$0xff]
    %v1738 = vld [vmem:[%s8 + $0x10] sm:$0xff]
    %v1739 = vld [vmem:[%s8 + $0x18] sm:$0xff]
    %v1740 = vld [vmem:[%s8 + $0x20] sm:$0xff]
    %v1741 = vld [vmem:[%s8 + $0x28] sm:$0xff]
    %v1742 = vld [vmem:[%s8 + $0x30] sm:$0x3]
    %v1743 = vld [vmem:[%s9] sm:$0x1]
    %v1745 = vlaneseq
    %v1746 = vshrl.u32 %v1745, 7
    %v1747 = vsub.s32 0, %v1746
    %v1748 = vrot.slane %v1743, %v1747
    %vm1750 = vcmask 408576
    %v1752 = vsel %vm1750, %v1735, 0
    %vm1754 = vcmask 1041408
    %v1756 = vsel %vm1754, %v1742, 0
    %1758 = vmatprep.subr.mxu0 0.0
    %1759 = vmatpush1.msra.mxu0 0.0
    %1760 = vmatprep.subr.mxu0 0.0
    %1761 = vmatpush1.msra.mxu0 0.0
    %1762 = vmatprep.subr.mxu0 0.0
    %1763 = vmatpush1.msra.mxu0 0.0
    %1764 = vmatprep.subr.mxu0 0.0
    %1765 = vmatpush1.msra.mxu0 0.0
    %1766 = vmatprep.subr.mxu0 0.0
    %1767 = vmatpush1.msra.mxu0 0.0
    %1768 = vmatprep.subr.mxu0 0.0
    %1769 = vmatpush1.msra.mxu0 0.0
    %1770 = vmatprep.subr.mxu0 0.0
    %1771 = vmatpush1.msra.mxu0 0.0
    %1772 = vmatprep.subr.mxu0 0.0
    %1773 = vmatpush1.msra.mxu0 0.0
    %1774 = vmatprep.subr.mxu0 0.0
    %1775 = vmatpush1.msra.mxu0 0.0
    %1776 = vmatprep.subr.mxu0 0.0
    %v1777 = vand.u32 %v1756, 4294901760
    %1778 = vmatpush1.msra.mxu0 %v1777
    %1779 = vmatprep.subr.mxu0 0.0
    %v1780 = vand.u32 %v1741, 4294901760
    %1781 = vmatpush1.msra.mxu0 %v1780
    %1782 = vmatprep.subr.mxu0 0.0
    %v1783 = vand.u32 %v1740, 4294901760
    %1784 = vmatpush1.msra.mxu0 %v1783
    %1785 = vmatprep.subr.mxu0 0.0
    %v1786 = vand.u32 %v1739, 4294901760
    %1787 = vmatpush1.msra.mxu0 %v1786
    %1788 = vmatprep.subr.mxu0 0.0
    %v1789 = vand.u32 %v1738, 4294901760
    %1790 = vmatpush1.msra.mxu0 %v1789
    %1791 = vmatprep.subr.mxu0 0.0
    %v1792 = vand.u32 %v1737, 4294901760
    %1793 = vmatpush1.msra.mxu0 %v1792
    %1794 = vmatprep.subr.mxu0 0.0
    %v1795 = vand.u32 %v1736, 4294901760
    %1796 = vmatpush1.msra.mxu0 %v1795
    %1797 = vmatprep.subr.mxu0 0.0
    %1798 = vmatpush2.msra.mxu0 0.0
    %1799 = vmatprep.subr.mxu0 0.0
    %1800 = vmatpush2.msra.mxu0 0.0
    %1801 = vmatprep.subr.mxu0 0.0
    %1802 = vmatpush2.msra.mxu0 0.0
    %1803 = vmatprep.subr.mxu0 0.0
    %1804 = vmatpush2.msra.mxu0 0.0
    %1805 = vmatprep.subr.mxu0 0.0
    %1806 = vmatpush2.msra.mxu0 0.0
    %1807 = vmatprep.subr.mxu0 0.0
    %1808 = vmatpush2.msra.mxu0 0.0
    %1809 = vmatprep.subr.mxu0 0.0
    %1810 = vmatpush2.msra.mxu0 0.0
    %1811 = vmatprep.subr.mxu0 0.0
    %1812 = vmatpush2.msra.mxu0 0.0
    %1813 = vmatprep.subr.mxu0 0.0
    %1814 = vmatpush2.msra.mxu0 0.0
    %1815 = vmatprep.subr.mxu0 0.0
    %1816 = vmatpush2.msra.mxu0 0.0
    %1817 = vmatprep.subr.mxu0 0.0
    %1818 = vmatpush2.msra.mxu0 0.0
    %1819 = vmatprep.subr.mxu0 0.0
    %1820 = vmatpush2.msra.mxu0 0.0
    %1821 = vmatprep.subr.mxu0 0.0
    %1822 = vmatpush2.msra.mxu0 0.0
    %1823 = vmatprep.subr.mxu0 0.0
    %1824 = vmatpush2.msra.mxu0 0.0
    %1825 = vmatprep.subr.mxu0 0.0
    %1826 = vmatpush2.msra.mxu0 0.0
    %1827 = vmatprep.subr.mxu0 0.0
    %1828 = vmatpush2.msra.mxu0 0.0
    %1829 = vmatprep.mubr.f32.mxu0 0.0
    %v1830 = vand.u32 %v1752, 4294901760
    %v1831 = vsub.f32 %v1752, %v1830
    %v1832 = vand.u32 %v1831, 4294901760
    %v1833 = vsub.f32 %v1831, %v1832
    %v1834 = vand.u32 %v1833, 4294901760
    %1835 = vmatmul.mubr.f32.gmra.mxu0 %v1834
    %v1836 = vpop.f32.mrf.mxu0
    %v1837 = vadd.f32 %v1748, %v1836
    %v1838 = vpop.f32.mrf.mxu0
    %1839 = vdwg.mxu0
    %1840 = vmatprep.subr.mxu0 0.0
    %1841 = vmatpush1.msra.mxu0 0.0
    %1842 = vmatprep.subr.mxu0 0.0
    %1843 = vmatpush1.msra.mxu0 0.0
    %1844 = vmatprep.subr.mxu0 0.0
    %1845 = vmatpush1.msra.mxu0 0.0
    %1846 = vmatprep.subr.mxu0 0.0
    %1847 = vmatpush1.msra.mxu0 0.0
    %1848 = vmatprep.subr.mxu0 0.0
    %1849 = vmatpush1.msra.mxu0 0.0
    %1850 = vmatprep.subr.mxu0 0.0
    %1851 = vmatpush1.msra.mxu0 0.0
    %1852 = vmatprep.subr.mxu0 0.0
    %1853 = vmatpush1.msra.mxu0 0.0
    %1854 = vmatprep.subr.mxu0 0.0
    %1855 = vmatpush1.msra.mxu0 0.0
    %1856 = vmatprep.subr.mxu0 0.0
    %1857 = vmatpush1.msra.mxu0 0.0
    %1858 = vmatprep.subr.mxu0 0.0
    %v1859 = vand.u32 %v1756, 4294901760
    %v1860 = vsub.f32 %v1756, %v1859
    %v1861 = vand.u32 %v1860, 4294901760
    %v1862 = vsub.f32 %v1860, %v1861
    %v1863 = vand.u32 %v1862, 4294901760
    %1864 = vmatpush1.msra.mxu0 %v1863
    %1865 = vmatprep.subr.mxu0 0.0
    %v1866 = vand.u32 %v1741, 4294901760
    %v1867 = vsub.f32 %v1741, %v1866
    %v1868 = vand.u32 %v1867, 4294901760
    %v1869 = vsub.f32 %v1867, %v1868
    %v1870 = vand.u32 %v1869, 4294901760
    %1871 = vmatpush1.msra.mxu0 %v1870
    %1872 = vmatprep.subr.mxu0 0.0
    %v1873 = vand.u32 %v1740, 4294901760
    %v1874 = vsub.f32 %v1740, %v1873
    %v1875 = vand.u32 %v1874, 4294901760
    %v1876 = vsub.f32 %v1874, %v1875
    %v1877 = vand.u32 %v1876, 4294901760
    %1878 = vmatpush1.msra.mxu0 %v1877
    %1879 = vmatprep.subr.mxu0 0.0
    %v1880 = vand.u32 %v1739, 4294901760
    %v1881 = vsub.f32 %v1739, %v1880
    %v1882 = vand.u32 %v1881, 4294901760
    %v1883 = vsub.f32 %v1881, %v1882
    %v1884 = vand.u32 %v1883, 4294901760
    %1885 = vmatpush1.msra.mxu0 %v1884
    %1886 = vmatprep.subr.mxu0 0.0
    %v1887 = vand.u32 %v1738, 4294901760
    %v1888 = vsub.f32 %v1738, %v1887
    %v1889 = vand.u32 %v1888, 4294901760
    %v1890 = vsub.f32 %v1888, %v1889
    %v1891 = vand.u32 %v1890, 4294901760
    %1892 = vmatpush1.msra.mxu0 %v1891
    %1893 = vmatprep.subr.mxu0 0.0
    %v1894 = vand.u32 %v1737, 4294901760
    %v1895 = vsub.f32 %v1737, %v1894
    %v1896 = vand.u32 %v1895, 4294901760
    %v1897 = vsub.f32 %v1895, %v1896
    %v1898 = vand.u32 %v1897, 4294901760
    %1899 = vmatpush1.msra.mxu0 %v1898
    %1900 = vmatprep.subr.mxu0 0.0
    %v1901 = vand.u32 %v1736, 4294901760
    %v1902 = vsub.f32 %v1736, %v1901
    %v1903 = vand.u32 %v1902, 4294901760
    %v1904 = vsub.f32 %v1902, %v1903
    %v1905 = vand.u32 %v1904, 4294901760
    %1906 = vmatpush1.msra.mxu0 %v1905
    %1907 = vmatprep.subr.mxu0 0.0
    %1908 = vmatpush2.msra.mxu0 0.0
    %1909 = vmatprep.subr.mxu0 0.0
    %1910 = vmatpush2.msra.mxu0 0.0
    %1911 = vmatprep.subr.mxu0 0.0
    %1912 = vmatpush2.msra.mxu0 0.0
    %1913 = vmatprep.subr.mxu0 0.0
    %1914 = vmatpush2.msra.mxu0 0.0
    %1915 = vmatprep.subr.mxu0 0.0
    %1916 = vmatpush2.msra.mxu0 0.0
    %1917 = vmatprep.subr.mxu0 0.0
    %1918 = vmatpush2.msra.mxu0 0.0
    %1919 = vmatprep.subr.mxu0 0.0
    %1920 = vmatpush2.msra.mxu0 0.0
    %1921 = vmatprep.subr.mxu0 0.0
    %1922 = vmatpush2.msra.mxu0 0.0
    %1923 = vmatprep.subr.mxu0 0.0
    %1924 = vmatpush2.msra.mxu0 0.0
    %1925 = vmatprep.subr.mxu0 0.0
    %1926 = vmatpush2.msra.mxu0 0.0
    %1927 = vmatprep.subr.mxu0 0.0
    %1928 = vmatpush2.msra.mxu0 0.0
    %1929 = vmatprep.subr.mxu0 0.0
    %1930 = vmatpush2.msra.mxu0 0.0
    %1931 = vmatprep.subr.mxu0 0.0
    %1932 = vmatpush2.msra.mxu0 0.0
    %1933 = vmatprep.subr.mxu0 0.0
    %1934 = vmatpush2.msra.mxu0 0.0
    %1935 = vmatprep.subr.mxu0 0.0
    %1936 = vmatpush2.msra.mxu0 0.0
    %1937 = vmatprep.subr.mxu0 0.0
    %1938 = vmatpush2.msra.mxu0 0.0
    %1939 = vmatprep.mubr.f32.mxu0 0.0
    %v1940 = vand.u32 %v1752, 4294901760
    %1941 = vmatmul.mubr.f32.gmra.mxu0 %v1940
    %v1942 = vpop.f32.mrf.mxu0
    %v1943 = vadd.f32 %v1837, %v1942
    %v1944 = vpop.f32.mrf.mxu0
    %1945 = vdwg.mxu0
    %1946 = vmatprep.subr.mxu0 0.0
    %1947 = vmatpush1.msra.mxu0 0.0
    %1948 = vmatprep.subr.mxu0 0.0
    %1949 = vmatpush1.msra.mxu0 0.0
    %1950 = vmatprep.subr.mxu0 0.0
    %1951 = vmatpush1.msra.mxu0 0.0
    %1952 = vmatprep.subr.mxu0 0.0
    %1953 = vmatpush1.msra.mxu0 0.0
    %1954 = vmatprep.subr.mxu0 0.0
    %1955 = vmatpush1.msra.mxu0 0.0
    %1956 = vmatprep.subr.mxu0 0.0
    %1957 = vmatpush1.msra.mxu0 0.0
    %1958 = vmatprep.subr.mxu0 0.0
    %1959 = vmatpush1.msra.mxu0 0.0
    %1960 = vmatprep.subr.mxu0 0.0
    %1961 = vmatpush1.msra.mxu0 0.0
    %1962 = vmatprep.subr.mxu0 0.0
    %1963 = vmatpush1.msra.mxu0 0.0
    %1964 = vmatprep.subr.mxu0 0.0
    %v1965 = vand.u32 %v1756, 4294901760
    %v1966 = vsub.f32 %v1756, %v1965
    %1967 = vmatpush1.msra.mxu0 %v1966
    %1968 = vmatprep.subr.mxu0 0.0
    %v1969 = vand.u32 %v1741, 4294901760
    %v1970 = vsub.f32 %v1741, %v1969
    %1971 = vmatpush1.msra.mxu0 %v1970
    %1972 = vmatprep.subr.mxu0 0.0
    %v1973 = vand.u32 %v1740, 4294901760
    %v1974 = vsub.f32 %v1740, %v1973
    %1975 = vmatpush1.msra.mxu0 %v1974
    %1976 = vmatprep.subr.mxu0 0.0
    %v1977 = vand.u32 %v1739, 4294901760
    %v1978 = vsub.f32 %v1739, %v1977
    %1979 = vmatpush1.msra.mxu0 %v1978
    %1980 = vmatprep.subr.mxu0 0.0
    %v1981 = vand.u32 %v1738, 4294901760
    %v1982 = vsub.f32 %v1738, %v1981
    %1983 = vmatpush1.msra.mxu0 %v1982
    %1984 = vmatprep.subr.mxu0 0.0
    %v1985 = vand.u32 %v1737, 4294901760
    %v1986 = vsub.f32 %v1737, %v1985
    %1987 = vmatpush1.msra.mxu0 %v1986
    %1988 = vmatprep.subr.mxu0 0.0
    %v1989 = vand.u32 %v1736, 4294901760
    %v1990 = vsub.f32 %v1736, %v1989
    %1991 = vmatpush1.msra.mxu0 %v1990
    %1992 = vmatprep.subr.mxu0 0.0
    %1993 = vmatpush2.msra.mxu0 0.0
    %1994 = vmatprep.subr.mxu0 0.0
    %1995 = vmatpush2.msra.mxu0 0.0
    %1996 = vmatprep.subr.mxu0 0.0
    %1997 = vmatpush2.msra.mxu0 0.0
    %1998 = vmatprep.subr.mxu0 0.0
    %1999 = vmatpush2.msra.mxu0 0.0
    %2000 = vmatprep.subr.mxu0 0.0
    %2001 = vmatpush2.msra.mxu0 0.0
    %2002 = vmatprep.subr.mxu0 0.0
    %2003 = vmatpush2.msra.mxu0 0.0
    %2004 = vmatprep.subr.mxu0 0.0
    %2005 = vmatpush2.msra.mxu0 0.0
    %2006 = vmatprep.subr.mxu0 0.0
    %2007 = vmatpush2.msra.mxu0 0.0
    %2008 = vmatprep.subr.mxu0 0.0
    %2009 = vmatpush2.msra.mxu0 0.0
    %2010 = vmatprep.subr.mxu0 0.0
    %2011 = vmatpush2.msra.mxu0 0.0
    %2012 = vmatprep.subr.mxu0 0.0
    %2013 = vmatpush2.msra.mxu0 0.0
    %2014 = vmatprep.subr.mxu0 0.0
    %2015 = vmatpush2.msra.mxu0 0.0
    %2016 = vmatprep.subr.mxu0 0.0
    %2017 = vmatpush2.msra.mxu0 0.0
    %2018 = vmatprep.subr.mxu0 0.0
    %2019 = vmatpush2.msra.mxu0 0.0
    %2020 = vmatprep.subr.mxu0 0.0
    %2021 = vmatpush2.msra.mxu0 0.0
    %2022 = vmatprep.subr.mxu0 0.0
    %2023 = vmatpush2.msra.mxu0 0.0
    %2024 = vmatprep.mubr.f32.mxu0 0.0
    %v2025 = vand.u32 %v1752, 4294901760
    %v2026 = vsub.f32 %v1752, %v2025
    %2027 = vmatmul.mubr.f32.gmra.mxu0 %v2026
    %v2028 = vpop.f32.mrf.mxu0
    %v2029 = vadd.f32 %v1943, %v2028
    %v2030 = vpop.f32.mrf.mxu0
    %2031 = vdwg.mxu0
    %2032 = vmatprep.subr.mxu0 0.0
    %2033 = vmatpush1.msra.mxu0 0.0
    %2034 = vmatprep.subr.mxu0 0.0
    %2035 = vmatpush1.msra.mxu0 0.0
    %2036 = vmatprep.subr.mxu0 0.0
    %2037 = vmatpush1.msra.mxu0 0.0
    %2038 = vmatprep.subr.mxu0 0.0
    %2039 = vmatpush1.msra.mxu0 0.0
    %2040 = vmatprep.subr.mxu0 0.0
    %2041 = vmatpush1.msra.mxu0 0.0
    %2042 = vmatprep.subr.mxu0 0.0
    %2043 = vmatpush1.msra.mxu0 0.0
    %2044 = vmatprep.subr.mxu0 0.0
    %2045 = vmatpush1.msra.mxu0 0.0
    %2046 = vmatprep.subr.mxu0 0.0
    %2047 = vmatpush1.msra.mxu0 0.0
    %2048 = vmatprep.subr.mxu0 0.0
    %2049 = vmatpush1.msra.mxu0 0.0
    %2050 = vmatprep.subr.mxu0 0.0
    %v2051 = vand.u32 %v1756, 4294901760
    %2052 = vmatpush1.msra.mxu0 %v2051
    %2053 = vmatprep.subr.mxu0 0.0
    %v2054 = vand.u32 %v1741, 4294901760
    %2055 = vmatpush1.msra.mxu0 %v2054
    %2056 = vmatprep.subr.mxu0 0.0
    %v2057 = vand.u32 %v1740, 4294901760
    %2058 = vmatpush1.msra.mxu0 %v2057
    %2059 = vmatprep.subr.mxu0 0.0
    %v2060 = vand.u32 %v1739, 4294901760
    %2061 = vmatpush1.msra.mxu0 %v2060
    %2062 = vmatprep.subr.mxu0 0.0
    %v2063 = vand.u32 %v1738, 4294901760
    %2064 = vmatpush1.msra.mxu0 %v2063
    %2065 = vmatprep.subr.mxu0 0.0
    %v2066 = vand.u32 %v1737, 4294901760
    %2067 = vmatpush1.msra.mxu0 %v2066
    %2068 = vmatprep.subr.mxu0 0.0
    %v2069 = vand.u32 %v1736, 4294901760
    %2070 = vmatpush1.msra.mxu0 %v2069
    %2071 = vmatprep.subr.mxu0 0.0
    %2072 = vmatpush2.msra.mxu0 0.0
    %2073 = vmatprep.subr.mxu0 0.0
    %2074 = vmatpush2.msra.mxu0 0.0
    %2075 = vmatprep.subr.mxu0 0.0
    %2076 = vmatpush2.msra.mxu0 0.0
    %2077 = vmatprep.subr.mxu0 0.0
    %2078 = vmatpush2.msra.mxu0 0.0
    %2079 = vmatprep.subr.mxu0 0.0
    %2080 = vmatpush2.msra.mxu0 0.0
    %2081 = vmatprep.subr.mxu0 0.0
    %2082 = vmatpush2.msra.mxu0 0.0
    %2083 = vmatprep.subr.mxu0 0.0
    %2084 = vmatpush2.msra.mxu0 0.0
    %2085 = vmatprep.subr.mxu0 0.0
    %2086 = vmatpush2.msra.mxu0 0.0
    %2087 = vmatprep.subr.mxu0 0.0
    %2088 = vmatpush2.msra.mxu0 0.0
    %2089 = vmatprep.subr.mxu0 0.0
    %2090 = vmatpush2.msra.mxu0 0.0
    %2091 = vmatprep.subr.mxu0 0.0
    %2092 = vmatpush2.msra.mxu0 0.0
    %2093 = vmatprep.subr.mxu0 0.0
    %2094 = vmatpush2.msra.mxu0 0.0
    %2095 = vmatprep.subr.mxu0 0.0
    %2096 = vmatpush2.msra.mxu0 0.0
    %2097 = vmatprep.subr.mxu0 0.0
    %2098 = vmatpush2.msra.mxu0 0.0
    %2099 = vmatprep.subr.mxu0 0.0
    %2100 = vmatpush2.msra.mxu0 0.0
    %2101 = vmatprep.subr.mxu0 0.0
    %2102 = vmatpush2.msra.mxu0 0.0
    %2103 = vmatprep.mubr.f32.mxu0 0.0
    %v2104 = vand.u32 %v1752, 4294901760
    %v2105 = vsub.f32 %v1752, %v2104
    %v2106 = vand.u32 %v2105, 4294901760
    %2107 = vmatmul.mubr.f32.gmra.mxu0 %v2106
    %v2108 = vpop.f32.mrf.mxu0
    %v2109 = vadd.f32 %v2029, %v2108
    %v2110 = vpop.f32.mrf.mxu0
    %2111 = vdwg.mxu0
    %2112 = vmatprep.subr.mxu0 0.0
    %2113 = vmatpush1.msra.mxu0 0.0
    %2114 = vmatprep.subr.mxu0 0.0
    %2115 = vmatpush1.msra.mxu0 0.0
    %2116 = vmatprep.subr.mxu0 0.0
    %2117 = vmatpush1.msra.mxu0 0.0
    %2118 = vmatprep.subr.mxu0 0.0
    %2119 = vmatpush1.msra.mxu0 0.0
    %2120 = vmatprep.subr.mxu0 0.0
    %2121 = vmatpush1.msra.mxu0 0.0
    %2122 = vmatprep.subr.mxu0 0.0
    %2123 = vmatpush1.msra.mxu0 0.0
    %2124 = vmatprep.subr.mxu0 0.0
    %2125 = vmatpush1.msra.mxu0 0.0
    %2126 = vmatprep.subr.mxu0 0.0
    %2127 = vmatpush1.msra.mxu0 0.0
    %2128 = vmatprep.subr.mxu0 0.0
    %2129 = vmatpush1.msra.mxu0 0.0
    %2130 = vmatprep.subr.mxu0 0.0
    %v2131 = vand.u32 %v1756, 4294901760
    %v2132 = vsub.f32 %v1756, %v2131
    %v2133 = vand.u32 %v2132, 4294901760
    %2134 = vmatpush1.msra.mxu0 %v2133
    %2135 = vmatprep.subr.mxu0 0.0
    %v2136 = vand.u32 %v1741, 4294901760
    %v2137 = vsub.f32 %v1741, %v2136
    %v2138 = vand.u32 %v2137, 4294901760
    %2139 = vmatpush1.msra.mxu0 %v2138
    %2140 = vmatprep.subr.mxu0 0.0
    %v2141 = vand.u32 %v1740, 4294901760
    %v2142 = vsub.f32 %v1740, %v2141
    %v2143 = vand.u32 %v2142, 4294901760
    %2144 = vmatpush1.msra.mxu0 %v2143
    %2145 = vmatprep.subr.mxu0 0.0
    %v2146 = vand.u32 %v1739, 4294901760
    %v2147 = vsub.f32 %v1739, %v2146
    %v2148 = vand.u32 %v2147, 4294901760
    %2149 = vmatpush1.msra.mxu0 %v2148
    %2150 = vmatprep.subr.mxu0 0.0
    %v2151 = vand.u32 %v1738, 4294901760
    %v2152 = vsub.f32 %v1738, %v2151
    %v2153 = vand.u32 %v2152, 4294901760
    %2154 = vmatpush1.msra.mxu0 %v2153
    %2155 = vmatprep.subr.mxu0 0.0
    %v2156 = vand.u32 %v1737, 4294901760
    %v2157 = vsub.f32 %v1737, %v2156
    %v2158 = vand.u32 %v2157, 4294901760
    %2159 = vmatpush1.msra.mxu0 %v2158
    %2160 = vmatprep.subr.mxu0 0.0
    %v2161 = vand.u32 %v1736, 4294901760
    %v2162 = vsub.f32 %v1736, %v2161
    %v2163 = vand.u32 %v2162, 4294901760
    %2164 = vmatpush1.msra.mxu0 %v2163
    %2165 = vmatprep.subr.mxu0 0.0
    %2166 = vmatpush2.msra.mxu0 0.0
    %2167 = vmatprep.subr.mxu0 0.0
    %2168 = vmatpush2.msra.mxu0 0.0
    %2169 = vmatprep.subr.mxu0 0.0
    %2170 = vmatpush2.msra.mxu0 0.0
    %2171 = vmatprep.subr.mxu0 0.0
    %2172 = vmatpush2.msra.mxu0 0.0
    %2173 = vmatprep.subr.mxu0 0.0
    %2174 = vmatpush2.msra.mxu0 0.0
    %2175 = vmatprep.subr.mxu0 0.0
    %2176 = vmatpush2.msra.mxu0 0.0
    %2177 = vmatprep.subr.mxu0 0.0
    %2178 = vmatpush2.msra.mxu0 0.0
    %2179 = vmatprep.subr.mxu0 0.0
    %2180 = vmatpush2.msra.mxu0 0.0
    %2181 = vmatprep.subr.mxu0 0.0
    %2182 = vmatpush2.msra.mxu0 0.0
    %2183 = vmatprep.subr.mxu0 0.0
    %2184 = vmatpush2.msra.mxu0 0.0
    %2185 = vmatprep.subr.mxu0 0.0
    %2186 = vmatpush2.msra.mxu0 0.0
    %2187 = vmatprep.subr.mxu0 0.0
    %2188 = vmatpush2.msra.mxu0 0.0
    %2189 = vmatprep.subr.mxu0 0.0
    %2190 = vmatpush2.msra.mxu0 0.0
    %2191 = vmatprep.subr.mxu0 0.0
    %2192 = vmatpush2.msra.mxu0 0.0
    %2193 = vmatprep.subr.mxu0 0.0
    %2194 = vmatpush2.msra.mxu0 0.0
    %2195 = vmatprep.subr.mxu0 0.0
    %2196 = vmatpush2.msra.mxu0 0.0
    %2197 = vmatprep.mubr.f32.mxu0 0.0
    %v2198 = vand.u32 %v1752, 4294901760
    %2199 = vmatmul.mubr.f32.gmra.mxu0 %v2198
    %v2200 = vpop.f32.mrf.mxu0
    %v2201 = vadd.f32 %v2109, %v2200
    %v2202 = vpop.f32.mrf.mxu0
    %2203 = vdwg.mxu0
    %2204 = vmatprep.subr.mxu0 0.0
    %2205 = vmatpush1.msra.mxu0 0.0
    %2206 = vmatprep.subr.mxu0 0.0
    %2207 = vmatpush1.msra.mxu0 0.0
    %2208 = vmatprep.subr.mxu0 0.0
    %2209 = vmatpush1.msra.mxu0 0.0
    %2210 = vmatprep.subr.mxu0 0.0
    %2211 = vmatpush1.msra.mxu0 0.0
    %2212 = vmatprep.subr.mxu0 0.0
    %2213 = vmatpush1.msra.mxu0 0.0
    %2214 = vmatprep.subr.mxu0 0.0
    %2215 = vmatpush1.msra.mxu0 0.0
    %2216 = vmatprep.subr.mxu0 0.0
    %2217 = vmatpush1.msra.mxu0 0.0
    %2218 = vmatprep.subr.mxu0 0.0
    %2219 = vmatpush1.msra.mxu0 0.0
    %2220 = vmatprep.subr.mxu0 0.0
    %2221 = vmatpush1.msra.mxu0 0.0
    %2222 = vmatprep.subr.mxu0 0.0
    %v2223 = vand.u32 %v1756, 4294901760
    %2224 = vmatpush1.msra.mxu0 %v2223
    %2225 = vmatprep.subr.mxu0 0.0
    %v2226 = vand.u32 %v1741, 4294901760
    %2227 = vmatpush1.msra.mxu0 %v2226
    %2228 = vmatprep.subr.mxu0 0.0
    %v2229 = vand.u32 %v1740, 4294901760
    %2230 = vmatpush1.msra.mxu0 %v2229
    %2231 = vmatprep.subr.mxu0 0.0
    %v2232 = vand.u32 %v1739, 4294901760
    %2233 = vmatpush1.msra.mxu0 %v2232
    %2234 = vmatprep.subr.mxu0 0.0
    %v2235 = vand.u32 %v1738, 4294901760
    %2236 = vmatpush1.msra.mxu0 %v2235
    %2237 = vmatprep.subr.mxu0 0.0
    %v2238 = vand.u32 %v1737, 4294901760
    %2239 = vmatpush1.msra.mxu0 %v2238
    %2240 = vmatprep.subr.mxu0 0.0
    %v2241 = vand.u32 %v1736, 4294901760
    %2242 = vmatpush1.msra.mxu0 %v2241
    %2243 = vmatprep.subr.mxu0 0.0
    %2244 = vmatpush2.msra.mxu0 0.0
    %2245 = vmatprep.subr.mxu0 0.0
    %2246 = vmatpush2.msra.mxu0 0.0
    %2247 = vmatprep.subr.mxu0 0.0
    %2248 = vmatpush2.msra.mxu0 0.0
    %2249 = vmatprep.subr.mxu0 0.0
    %2250 = vmatpush2.msra.mxu0 0.0
    %2251 = vmatprep.subr.mxu0 0.0
    %2252 = vmatpush2.msra.mxu0 0.0
    %2253 = vmatprep.subr.mxu0 0.0
    %2254 = vmatpush2.msra.mxu0 0.0
    %2255 = vmatprep.subr.mxu0 0.0
    %2256 = vmatpush2.msra.mxu0 0.0
    %2257 = vmatprep.subr.mxu0 0.0
    %2258 = vmatpush2.msra.mxu0 0.0
    %2259 = vmatprep.subr.mxu0 0.0
    %2260 = vmatpush2.msra.mxu0 0.0
    %2261 = vmatprep.subr.mxu0 0.0
    %2262 = vmatpush2.msra.mxu0 0.0
    %2263 = vmatprep.subr.mxu0 0.0
    %2264 = vmatpush2.msra.mxu0 0.0
    %2265 = vmatprep.subr.mxu0 0.0
    %2266 = vmatpush2.msra.mxu0 0.0
    %2267 = vmatprep.subr.mxu0 0.0
    %2268 = vmatpush2.msra.mxu0 0.0
    %2269 = vmatprep.subr.mxu0 0.0
    %2270 = vmatpush2.msra.mxu0 0.0
    %2271 = vmatprep.subr.mxu0 0.0
    %2272 = vmatpush2.msra.mxu0 0.0
    %2273 = vmatprep.subr.mxu0 0.0
    %2274 = vmatpush2.msra.mxu0 0.0
    %2275 = vmatprep.mubr.f32.mxu0 0.0
    %v2276 = vand.u32 %v1752, 4294901760
    %2277 = vmatmul.mubr.f32.gmra.mxu0 %v2276
    %v2278 = vpop.f32.mrf.mxu0
    %v2279 = vadd.f32 %v2201, %v2278
    %v2280 = vpop.f32.mrf.mxu0
    %2281 = vdwg.mxu0
    %v2282 = vmax.f32 %v2279, 0.0
    %v2283 = vld [vmem:[%s10] sm:$0xff]
    %v2284 = vld [vmem:[%s10 + $0x8] sm:$0xff]
    %v2285 = vld [vmem:[%s10 + $0x10] sm:$0xff]
    %v2286 = vld [vmem:[%s10 + $0x18] sm:$0xff]
    %v2287 = vld [vmem:[%s10 + $0x20] sm:$0xff]
    %v2288 = vld [vmem:[%s10 + $0x28] sm:$0xff]
    %v2289 = vld [vmem:[%s10 + $0x30] sm:$0xff]
    %v2290 = vld [vmem:[%s10 + $0x38] sm:$0xff]
    %v2291 = vld [vmem:[%s11] sm:$0x1]
    %v2293 = vlaneseq
    %v2294 = vshrl.u32 %v2293, 7
    %v2295 = vsub.s32 0, %v2294
    %v2296 = vrot.slane %v2291, %v2295
    %v2299 = vsel %vm637, %v2282, 0
    %2301 = vmatprep.subr.mxu0 0.0
    %2302 = vmatpush1.msra.mxu0 0.0
    %2303 = vmatprep.subr.mxu0 0.0
    %2304 = vmatpush1.msra.mxu0 0.0
    %2305 = vmatprep.subr.mxu0 0.0
    %2306 = vmatpush1.msra.mxu0 0.0
    %2307 = vmatprep.subr.mxu0 0.0
    %2308 = vmatpush1.msra.mxu0 0.0
    %2309 = vmatprep.subr.mxu0 0.0
    %2310 = vmatpush1.msra.mxu0 0.0
    %2311 = vmatprep.subr.mxu0 0.0
    %2312 = vmatpush1.msra.mxu0 0.0
    %2313 = vmatprep.subr.mxu0 0.0
    %2314 = vmatpush1.msra.mxu0 0.0
    %2315 = vmatprep.subr.mxu0 0.0
    %2316 = vmatpush1.msra.mxu0 0.0
    %2317 = vmatprep.subr.mxu0 0.0
    %v2318 = vand.u32 %v2290, 4294901760
    %2319 = vmatpush1.msra.mxu0 %v2318
    %2320 = vmatprep.subr.mxu0 0.0
    %v2321 = vand.u32 %v2289, 4294901760
    %2322 = vmatpush1.msra.mxu0 %v2321
    %2323 = vmatprep.subr.mxu0 0.0
    %v2324 = vand.u32 %v2288, 4294901760
    %2325 = vmatpush1.msra.mxu0 %v2324
    %2326 = vmatprep.subr.mxu0 0.0
    %v2327 = vand.u32 %v2287, 4294901760
    %2328 = vmatpush1.msra.mxu0 %v2327
    %2329 = vmatprep.subr.mxu0 0.0
    %v2330 = vand.u32 %v2286, 4294901760
    %2331 = vmatpush1.msra.mxu0 %v2330
    %2332 = vmatprep.subr.mxu0 0.0
    %v2333 = vand.u32 %v2285, 4294901760
    %2334 = vmatpush1.msra.mxu0 %v2333
    %2335 = vmatprep.subr.mxu0 0.0
    %v2336 = vand.u32 %v2284, 4294901760
    %2337 = vmatpush1.msra.mxu0 %v2336
    %2338 = vmatprep.subr.mxu0 0.0
    %v2339 = vand.u32 %v2283, 4294901760
    %2340 = vmatpush1.msra.mxu0 %v2339
    %2341 = vmatprep.subr.mxu0 0.0
    %2342 = vmatpush2.msra.mxu0 0.0
    %2343 = vmatprep.subr.mxu0 0.0
    %2344 = vmatpush2.msra.mxu0 0.0
    %2345 = vmatprep.subr.mxu0 0.0
    %2346 = vmatpush2.msra.mxu0 0.0
    %2347 = vmatprep.subr.mxu0 0.0
    %2348 = vmatpush2.msra.mxu0 0.0
    %2349 = vmatprep.subr.mxu0 0.0
    %2350 = vmatpush2.msra.mxu0 0.0
    %2351 = vmatprep.subr.mxu0 0.0
    %2352 = vmatpush2.msra.mxu0 0.0
    %2353 = vmatprep.subr.mxu0 0.0
    %2354 = vmatpush2.msra.mxu0 0.0
    %2355 = vmatprep.subr.mxu0 0.0
    %2356 = vmatpush2.msra.mxu0 0.0
    %2357 = vmatprep.subr.mxu0 0.0
    %2358 = vmatpush2.msra.mxu0 0.0
    %2359 = vmatprep.subr.mxu0 0.0
    %2360 = vmatpush2.msra.mxu0 0.0
    %2361 = vmatprep.subr.mxu0 0.0
    %2362 = vmatpush2.msra.mxu0 0.0
    %2363 = vmatprep.subr.mxu0 0.0
    %2364 = vmatpush2.msra.mxu0 0.0
    %2365 = vmatprep.subr.mxu0 0.0
    %2366 = vmatpush2.msra.mxu0 0.0
    %2367 = vmatprep.subr.mxu0 0.0
    %2368 = vmatpush2.msra.mxu0 0.0
    %2369 = vmatprep.subr.mxu0 0.0
    %2370 = vmatpush2.msra.mxu0 0.0
    %2371 = vmatprep.subr.mxu0 0.0
    %2372 = vmatpush2.msra.mxu0 0.0
    %2373 = vmatprep.mubr.f32.mxu0 0.0
    %v2374 = vand.u32 %v2299, 4294901760
    %v2375 = vsub.f32 %v2299, %v2374
    %v2376 = vand.u32 %v2375, 4294901760
    %v2377 = vsub.f32 %v2375, %v2376
    %v2378 = vand.u32 %v2377, 4294901760
    %2379 = vmatmul.mubr.f32.gmra.mxu0 %v2378
    %v2380 = vpop.f32.mrf.mxu0
    %v2381 = vadd.f32 %v2296, %v2380
    %v2382 = vpop.f32.mrf.mxu0
    %2383 = vdwg.mxu0
    %2384 = vmatprep.subr.mxu0 0.0
    %2385 = vmatpush1.msra.mxu0 0.0
    %2386 = vmatprep.subr.mxu0 0.0
    %2387 = vmatpush1.msra.mxu0 0.0
    %2388 = vmatprep.subr.mxu0 0.0
    %2389 = vmatpush1.msra.mxu0 0.0
    %2390 = vmatprep.subr.mxu0 0.0
    %2391 = vmatpush1.msra.mxu0 0.0
    %2392 = vmatprep.subr.mxu0 0.0
    %2393 = vmatpush1.msra.mxu0 0.0
    %2394 = vmatprep.subr.mxu0 0.0
    %2395 = vmatpush1.msra.mxu0 0.0
    %2396 = vmatprep.subr.mxu0 0.0
    %2397 = vmatpush1.msra.mxu0 0.0
    %2398 = vmatprep.subr.mxu0 0.0
    %2399 = vmatpush1.msra.mxu0 0.0
    %2400 = vmatprep.subr.mxu0 0.0
    %v2401 = vand.u32 %v2290, 4294901760
    %v2402 = vsub.f32 %v2290, %v2401
    %v2403 = vand.u32 %v2402, 4294901760
    %v2404 = vsub.f32 %v2402, %v2403
    %v2405 = vand.u32 %v2404, 4294901760
    %2406 = vmatpush1.msra.mxu0 %v2405
    %2407 = vmatprep.subr.mxu0 0.0
    %v2408 = vand.u32 %v2289, 4294901760
    %v2409 = vsub.f32 %v2289, %v2408
    %v2410 = vand.u32 %v2409, 4294901760
    %v2411 = vsub.f32 %v2409, %v2410
    %v2412 = vand.u32 %v2411, 4294901760
    %2413 = vmatpush1.msra.mxu0 %v2412
    %2414 = vmatprep.subr.mxu0 0.0
    %v2415 = vand.u32 %v2288, 4294901760
    %v2416 = vsub.f32 %v2288, %v2415
    %v2417 = vand.u32 %v2416, 4294901760
    %v2418 = vsub.f32 %v2416, %v2417
    %v2419 = vand.u32 %v2418, 4294901760
    %2420 = vmatpush1.msra.mxu0 %v2419
    %2421 = vmatprep.subr.mxu0 0.0
    %v2422 = vand.u32 %v2287, 4294901760
    %v2423 = vsub.f32 %v2287, %v2422
    %v2424 = vand.u32 %v2423, 4294901760
    %v2425 = vsub.f32 %v2423, %v2424
    %v2426 = vand.u32 %v2425, 4294901760
    %2427 = vmatpush1.msra.mxu0 %v2426
    %2428 = vmatprep.subr.mxu0 0.0
    %v2429 = vand.u32 %v2286, 4294901760
    %v2430 = vsub.f32 %v2286, %v2429
    %v2431 = vand.u32 %v2430, 4294901760
    %v2432 = vsub.f32 %v2430, %v2431
    %v2433 = vand.u32 %v2432, 4294901760
    %2434 = vmatpush1.msra.mxu0 %v2433
    %2435 = vmatprep.subr.mxu0 0.0
    %v2436 = vand.u32 %v2285, 4294901760
    %v2437 = vsub.f32 %v2285, %v2436
    %v2438 = vand.u32 %v2437, 4294901760
    %v2439 = vsub.f32 %v2437, %v2438
    %v2440 = vand.u32 %v2439, 4294901760
    %2441 = vmatpush1.msra.mxu0 %v2440
    %2442 = vmatprep.subr.mxu0 0.0
    %v2443 = vand.u32 %v2284, 4294901760
    %v2444 = vsub.f32 %v2284, %v2443
    %v2445 = vand.u32 %v2444, 4294901760
    %v2446 = vsub.f32 %v2444, %v2445
    %v2447 = vand.u32 %v2446, 4294901760
    %2448 = vmatpush1.msra.mxu0 %v2447
    %2449 = vmatprep.subr.mxu0 0.0
    %v2450 = vand.u32 %v2283, 4294901760
    %v2451 = vsub.f32 %v2283, %v2450
    %v2452 = vand.u32 %v2451, 4294901760
    %v2453 = vsub.f32 %v2451, %v2452
    %v2454 = vand.u32 %v2453, 4294901760
    %2455 = vmatpush1.msra.mxu0 %v2454
    %2456 = vmatprep.subr.mxu0 0.0
    %2457 = vmatpush2.msra.mxu0 0.0
    %2458 = vmatprep.subr.mxu0 0.0
    %2459 = vmatpush2.msra.mxu0 0.0
    %2460 = vmatprep.subr.mxu0 0.0
    %2461 = vmatpush2.msra.mxu0 0.0
    %2462 = vmatprep.subr.mxu0 0.0
    %2463 = vmatpush2.msra.mxu0 0.0
    %2464 = vmatprep.subr.mxu0 0.0
    %2465 = vmatpush2.msra.mxu0 0.0
    %2466 = vmatprep.subr.mxu0 0.0
    %2467 = vmatpush2.msra.mxu0 0.0
    %2468 = vmatprep.subr.mxu0 0.0
    %2469 = vmatpush2.msra.mxu0 0.0
    %2470 = vmatprep.subr.mxu0 0.0
    %2471 = vmatpush2.msra.mxu0 0.0
    %2472 = vmatprep.subr.mxu0 0.0
    %2473 = vmatpush2.msra.mxu0 0.0
    %2474 = vmatprep.subr.mxu0 0.0
    %2475 = vmatpush2.msra.mxu0 0.0
    %2476 = vmatprep.subr.mxu0 0.0
    %2477 = vmatpush2.msra.mxu0 0.0
    %2478 = vmatprep.subr.mxu0 0.0
    %2479 = vmatpush2.msra.mxu0 0.0
    %2480 = vmatprep.subr.mxu0 0.0
    %2481 = vmatpush2.msra.mxu0 0.0
    %2482 = vmatprep.subr.mxu0 0.0
    %2483 = vmatpush2.msra.mxu0 0.0
    %2484 = vmatprep.subr.mxu0 0.0
    %2485 = vmatpush2.msra.mxu0 0.0
    %2486 = vmatprep.subr.mxu0 0.0
    %2487 = vmatpush2.msra.mxu0 0.0
    %2488 = vmatprep.mubr.f32.mxu0 0.0
    %v2489 = vand.u32 %v2299, 4294901760
    %2490 = vmatmul.mubr.f32.gmra.mxu0 %v2489
    %v2491 = vpop.f32.mrf.mxu0
    %v2492 = vadd.f32 %v2381, %v2491
    %v2493 = vpop.f32.mrf.mxu0
    %2494 = vdwg.mxu0
    %2495 = vmatprep.subr.mxu0 0.0
    %2496 = vmatpush1.msra.mxu0 0.0
    %2497 = vmatprep.subr.mxu0 0.0
    %2498 = vmatpush1.msra.mxu0 0.0
    %2499 = vmatprep.subr.mxu0 0.0
    %2500 = vmatpush1.msra.mxu0 0.0
    %2501 = vmatprep.subr.mxu0 0.0
    %2502 = vmatpush1.msra.mxu0 0.0
    %2503 = vmatprep.subr.mxu0 0.0
    %2504 = vmatpush1.msra.mxu0 0.0
    %2505 = vmatprep.subr.mxu0 0.0
    %2506 = vmatpush1.msra.mxu0 0.0
    %2507 = vmatprep.subr.mxu0 0.0
    %2508 = vmatpush1.msra.mxu0 0.0
    %2509 = vmatprep.subr.mxu0 0.0
    %2510 = vmatpush1.msra.mxu0 0.0
    %2511 = vmatprep.subr.mxu0 0.0
    %v2512 = vand.u32 %v2290, 4294901760
    %v2513 = vsub.f32 %v2290, %v2512
    %2514 = vmatpush1.msra.mxu0 %v2513
    %2515 = vmatprep.subr.mxu0 0.0
    %v2516 = vand.u32 %v2289, 4294901760
    %v2517 = vsub.f32 %v2289, %v2516
    %2518 = vmatpush1.msra.mxu0 %v2517
    %2519 = vmatprep.subr.mxu0 0.0
    %v2520 = vand.u32 %v2288, 4294901760
    %v2521 = vsub.f32 %v2288, %v2520
    %2522 = vmatpush1.msra.mxu0 %v2521
    %2523 = vmatprep.subr.mxu0 0.0
    %v2524 = vand.u32 %v2287, 4294901760
    %v2525 = vsub.f32 %v2287, %v2524
    %2526 = vmatpush1.msra.mxu0 %v2525
    %2527 = vmatprep.subr.mxu0 0.0
    %v2528 = vand.u32 %v2286, 4294901760
    %v2529 = vsub.f32 %v2286, %v2528
    %2530 = vmatpush1.msra.mxu0 %v2529
    %2531 = vmatprep.subr.mxu0 0.0
    %v2532 = vand.u32 %v2285, 4294901760
    %v2533 = vsub.f32 %v2285, %v2532
    %2534 = vmatpush1.msra.mxu0 %v2533
    %2535 = vmatprep.subr.mxu0 0.0
    %v2536 = vand.u32 %v2284, 4294901760
    %v2537 = vsub.f32 %v2284, %v2536
    %2538 = vmatpush1.msra.mxu0 %v2537
    %2539 = vmatprep.subr.mxu0 0.0
    %v2540 = vand.u32 %v2283, 4294901760
    %v2541 = vsub.f32 %v2283, %v2540
    %2542 = vmatpush1.msra.mxu0 %v2541
    %2543 = vmatprep.subr.mxu0 0.0
    %2544 = vmatpush2.msra.mxu0 0.0
    %2545 = vmatprep.subr.mxu0 0.0
    %2546 = vmatpush2.msra.mxu0 0.0
    %2547 = vmatprep.subr.mxu0 0.0
    %2548 = vmatpush2.msra.mxu0 0.0
    %2549 = vmatprep.subr.mxu0 0.0
    %2550 = vmatpush2.msra.mxu0 0.0
    %2551 = vmatprep.subr.mxu0 0.0
    %2552 = vmatpush2.msra.mxu0 0.0
    %2553 = vmatprep.subr.mxu0 0.0
    %2554 = vmatpush2.msra.mxu0 0.0
    %2555 = vmatprep.subr.mxu0 0.0
    %2556 = vmatpush2.msra.mxu0 0.0
    %2557 = vmatprep.subr.mxu0 0.0
    %2558 = vmatpush2.msra.mxu0 0.0
    %2559 = vmatprep.subr.mxu0 0.0
    %2560 = vmatpush2.msra.mxu0 0.0
    %2561 = vmatprep.subr.mxu0 0.0
    %2562 = vmatpush2.msra.mxu0 0.0
    %2563 = vmatprep.subr.mxu0 0.0
    %2564 = vmatpush2.msra.mxu0 0.0
    %2565 = vmatprep.subr.mxu0 0.0
    %2566 = vmatpush2.msra.mxu0 0.0
    %2567 = vmatprep.subr.mxu0 0.0
    %2568 = vmatpush2.msra.mxu0 0.0
    %2569 = vmatprep.subr.mxu0 0.0
    %2570 = vmatpush2.msra.mxu0 0.0
    %2571 = vmatprep.subr.mxu0 0.0
    %2572 = vmatpush2.msra.mxu0 0.0
    %2573 = vmatprep.subr.mxu0 0.0
    %2574 = vmatpush2.msra.mxu0 0.0
    %2575 = vmatprep.mubr.f32.mxu0 0.0
    %v2576 = vand.u32 %v2299, 4294901760
    %v2577 = vsub.f32 %v2299, %v2576
    %2578 = vmatmul.mubr.f32.gmra.mxu0 %v2577
    %v2579 = vpop.f32.mrf.mxu0
    %v2580 = vadd.f32 %v2492, %v2579
    %v2581 = vpop.f32.mrf.mxu0
    %2582 = vdwg.mxu0
    %2583 = vmatprep.subr.mxu0 0.0
    %2584 = vmatpush1.msra.mxu0 0.0
    %2585 = vmatprep.subr.mxu0 0.0
    %2586 = vmatpush1.msra.mxu0 0.0
    %2587 = vmatprep.subr.mxu0 0.0
    %2588 = vmatpush1.msra.mxu0 0.0
    %2589 = vmatprep.subr.mxu0 0.0
    %2590 = vmatpush1.msra.mxu0 0.0
    %2591 = vmatprep.subr.mxu0 0.0
    %2592 = vmatpush1.msra.mxu0 0.0
    %2593 = vmatprep.subr.mxu0 0.0
    %2594 = vmatpush1.msra.mxu0 0.0
    %2595 = vmatprep.subr.mxu0 0.0
    %2596 = vmatpush1.msra.mxu0 0.0
    %2597 = vmatprep.subr.mxu0 0.0
    %2598 = vmatpush1.msra.mxu0 0.0
    %2599 = vmatprep.subr.mxu0 0.0
    %v2600 = vand.u32 %v2290, 4294901760
    %2601 = vmatpush1.msra.mxu0 %v2600
    %2602 = vmatprep.subr.mxu0 0.0
    %v2603 = vand.u32 %v2289, 4294901760
    %2604 = vmatpush1.msra.mxu0 %v2603
    %2605 = vmatprep.subr.mxu0 0.0
    %v2606 = vand.u32 %v2288, 4294901760
    %2607 = vmatpush1.msra.mxu0 %v2606
    %2608 = vmatprep.subr.mxu0 0.0
    %v2609 = vand.u32 %v2287, 4294901760
    %2610 = vmatpush1.msra.mxu0 %v2609
    %2611 = vmatprep.subr.mxu0 0.0
    %v2612 = vand.u32 %v2286, 4294901760
    %2613 = vmatpush1.msra.mxu0 %v2612
    %2614 = vmatprep.subr.mxu0 0.0
    %v2615 = vand.u32 %v2285, 4294901760
    %2616 = vmatpush1.msra.mxu0 %v2615
    %2617 = vmatprep.subr.mxu0 0.0
    %v2618 = vand.u32 %v2284, 4294901760
    %2619 = vmatpush1.msra.mxu0 %v2618
    %2620 = vmatprep.subr.mxu0 0.0
    %v2621 = vand.u32 %v2283, 4294901760
    %2622 = vmatpush1.msra.mxu0 %v2621
    %2623 = vmatprep.subr.mxu0 0.0
    %2624 = vmatpush2.msra.mxu0 0.0
    %2625 = vmatprep.subr.mxu0 0.0
    %2626 = vmatpush2.msra.mxu0 0.0
    %2627 = vmatprep.subr.mxu0 0.0
    %2628 = vmatpush2.msra.mxu0 0.0
    %2629 = vmatprep.subr.mxu0 0.0
    %2630 = vmatpush2.msra.mxu0 0.0
    %2631 = vmatprep.subr.mxu0 0.0
    %2632 = vmatpush2.msra.mxu0 0.0
    %2633 = vmatprep.subr.mxu0 0.0
    %2634 = vmatpush2.msra.mxu0 0.0
    %2635 = vmatprep.subr.mxu0 0.0
    %2636 = vmatpush2.msra.mxu0 0.0
    %2637 = vmatprep.subr.mxu0 0.0
    %2638 = vmatpush2.msra.mxu0 0.0
    %2639 = vmatprep.subr.mxu0 0.0
    %2640 = vmatpush2.msra.mxu0 0.0
    %2641 = vmatprep.subr.mxu0 0.0
    %2642 = vmatpush2.msra.mxu0 0.0
    %2643 = vmatprep.subr.mxu0 0.0
    %2644 = vmatpush2.msra.mxu0 0.0
    %2645 = vmatprep.subr.mxu0 0.0
    %2646 = vmatpush2.msra.mxu0 0.0
    %2647 = vmatprep.subr.mxu0 0.0
    %2648 = vmatpush2.msra.mxu0 0.0
    %2649 = vmatprep.subr.mxu0 0.0
    %2650 = vmatpush2.msra.mxu0 0.0
    %2651 = vmatprep.subr.mxu0 0.0
    %2652 = vmatpush2.msra.mxu0 0.0
    %2653 = vmatprep.subr.mxu0 0.0
    %2654 = vmatpush2.msra.mxu0 0.0
    %2655 = vmatprep.mubr.f32.mxu0 0.0
    %v2656 = vand.u32 %v2299, 4294901760
    %v2657 = vsub.f32 %v2299, %v2656
    %v2658 = vand.u32 %v2657, 4294901760
    %2659 = vmatmul.mubr.f32.gmra.mxu0 %v2658
    %v2660 = vpop.f32.mrf.mxu0
    %v2661 = vadd.f32 %v2580, %v2660
    %v2662 = vpop.f32.mrf.mxu0
    %2663 = vdwg.mxu0
    %2664 = vmatprep.subr.mxu0 0.0
    %2665 = vmatpush1.msra.mxu0 0.0
    %2666 = vmatprep.subr.mxu0 0.0
    %2667 = vmatpush1.msra.mxu0 0.0
    %2668 = vmatprep.subr.mxu0 0.0
    %2669 = vmatpush1.msra.mxu0 0.0
    %2670 = vmatprep.subr.mxu0 0.0
    %2671 = vmatpush1.msra.mxu0 0.0
    %2672 = vmatprep.subr.mxu0 0.0
    %2673 = vmatpush1.msra.mxu0 0.0
    %2674 = vmatprep.subr.mxu0 0.0
    %2675 = vmatpush1.msra.mxu0 0.0
    %2676 = vmatprep.subr.mxu0 0.0
    %2677 = vmatpush1.msra.mxu0 0.0
    %2678 = vmatprep.subr.mxu0 0.0
    %2679 = vmatpush1.msra.mxu0 0.0
    %2680 = vmatprep.subr.mxu0 0.0
    %v2681 = vand.u32 %v2290, 4294901760
    %v2682 = vsub.f32 %v2290, %v2681
    %v2683 = vand.u32 %v2682, 4294901760
    %2684 = vmatpush1.msra.mxu0 %v2683
    %2685 = vmatprep.subr.mxu0 0.0
    %v2686 = vand.u32 %v2289, 4294901760
    %v2687 = vsub.f32 %v2289, %v2686
    %v2688 = vand.u32 %v2687, 4294901760
    %2689 = vmatpush1.msra.mxu0 %v2688
    %2690 = vmatprep.subr.mxu0 0.0
    %v2691 = vand.u32 %v2288, 4294901760
    %v2692 = vsub.f32 %v2288, %v2691
    %v2693 = vand.u32 %v2692, 4294901760
    %2694 = vmatpush1.msra.mxu0 %v2693
    %2695 = vmatprep.subr.mxu0 0.0
    %v2696 = vand.u32 %v2287, 4294901760
    %v2697 = vsub.f32 %v2287, %v2696
    %v2698 = vand.u32 %v2697, 4294901760
    %2699 = vmatpush1.msra.mxu0 %v2698
    %2700 = vmatprep.subr.mxu0 0.0
    %v2701 = vand.u32 %v2286, 4294901760
    %v2702 = vsub.f32 %v2286, %v2701
    %v2703 = vand.u32 %v2702, 4294901760
    %2704 = vmatpush1.msra.mxu0 %v2703
    %2705 = vmatprep.subr.mxu0 0.0
    %v2706 = vand.u32 %v2285, 4294901760
    %v2707 = vsub.f32 %v2285, %v2706
    %v2708 = vand.u32 %v2707, 4294901760
    %2709 = vmatpush1.msra.mxu0 %v2708
    %2710 = vmatprep.subr.mxu0 0.0
    %v2711 = vand.u32 %v2284, 4294901760
    %v2712 = vsub.f32 %v2284, %v2711
    %v2713 = vand.u32 %v2712, 4294901760
    %2714 = vmatpush1.msra.mxu0 %v2713
    %2715 = vmatprep.subr.mxu0 0.0
    %v2716 = vand.u32 %v2283, 4294901760
    %v2717 = vsub.f32 %v2283, %v2716
    %v2718 = vand.u32 %v2717, 4294901760
    %2719 = vmatpush1.msra.mxu0 %v2718
    %2720 = vmatprep.subr.mxu0 0.0
    %2721 = vmatpush2.msra.mxu0 0.0
    %2722 = vmatprep.subr.mxu0 0.0
    %2723 = vmatpush2.msra.mxu0 0.0
    %2724 = vmatprep.subr.mxu0 0.0
    %2725 = vmatpush2.msra.mxu0 0.0
    %2726 = vmatprep.subr.mxu0 0.0
    %2727 = vmatpush2.msra.mxu0 0.0
    %2728 = vmatprep.subr.mxu0 0.0
    %2729 = vmatpush2.msra.mxu0 0.0
    %2730 = vmatprep.subr.mxu0 0.0
    %2731 = vmatpush2.msra.mxu0 0.0
    %2732 = vmatprep.subr.mxu0 0.0
    %2733 = vmatpush2.msra.mxu0 0.0
    %2734 = vmatprep.subr.mxu0 0.0
    %2735 = vmatpush2.msra.mxu0 0.0
    %2736 = vmatprep.subr.mxu0 0.0
    %2737 = vmatpush2.msra.mxu0 0.0
    %2738 = vmatprep.subr.mxu0 0.0
    %2739 = vmatpush2.msra.mxu0 0.0
    %2740 = vmatprep.subr.mxu0 0.0
    %2741 = vmatpush2.msra.mxu0 0.0
    %2742 = vmatprep.subr.mxu0 0.0
    %2743 = vmatpush2.msra.mxu0 0.0
    %2744 = vmatprep.subr.mxu0 0.0
    %2745 = vmatpush2.msra.mxu0 0.0
    %2746 = vmatprep.subr.mxu0 0.0
    %2747 = vmatpush2.msra.mxu0 0.0
    %2748 = vmatprep.subr.mxu0 0.0
    %2749 = vmatpush2.msra.mxu0 0.0
    %2750 = vmatprep.subr.mxu0 0.0
    %2751 = vmatpush2.msra.mxu0 0.0
    %2752 = vmatprep.mubr.f32.mxu0 0.0
    %v2753 = vand.u32 %v2299, 4294901760
    %2754 = vmatmul.mubr.f32.gmra.mxu0 %v2753
    %v2755 = vpop.f32.mrf.mxu0
    %v2756 = vadd.f32 %v2661, %v2755
    %v2757 = vpop.f32.mrf.mxu0
    %2758 = vdwg.mxu0
    %2759 = vmatprep.subr.mxu0 0.0
    %2760 = vmatpush1.msra.mxu0 0.0
    %2761 = vmatprep.subr.mxu0 0.0
    %2762 = vmatpush1.msra.mxu0 0.0
    %2763 = vmatprep.subr.mxu0 0.0
    %2764 = vmatpush1.msra.mxu0 0.0
    %2765 = vmatprep.subr.mxu0 0.0
    %2766 = vmatpush1.msra.mxu0 0.0
    %2767 = vmatprep.subr.mxu0 0.0
    %2768 = vmatpush1.msra.mxu0 0.0
    %2769 = vmatprep.subr.mxu0 0.0
    %2770 = vmatpush1.msra.mxu0 0.0
    %2771 = vmatprep.subr.mxu0 0.0
    %2772 = vmatpush1.msra.mxu0 0.0
    %2773 = vmatprep.subr.mxu0 0.0
    %2774 = vmatpush1.msra.mxu0 0.0
    %2775 = vmatprep.subr.mxu0 0.0
    %v2776 = vand.u32 %v2290, 4294901760
    %2777 = vmatpush1.msra.mxu0 %v2776
    %2778 = vmatprep.subr.mxu0 0.0
    %v2779 = vand.u32 %v2289, 4294901760
    %2780 = vmatpush1.msra.mxu0 %v2779
    %2781 = vmatprep.subr.mxu0 0.0
    %v2782 = vand.u32 %v2288, 4294901760
    %2783 = vmatpush1.msra.mxu0 %v2782
    %2784 = vmatprep.subr.mxu0 0.0
    %v2785 = vand.u32 %v2287, 4294901760
    %2786 = vmatpush1.msra.mxu0 %v2785
    %2787 = vmatprep.subr.mxu0 0.0
    %v2788 = vand.u32 %v2286, 4294901760
    %2789 = vmatpush1.msra.mxu0 %v2788
    %2790 = vmatprep.subr.mxu0 0.0
    %v2791 = vand.u32 %v2285, 4294901760
    %2792 = vmatpush1.msra.mxu0 %v2791
    %2793 = vmatprep.subr.mxu0 0.0
    %v2794 = vand.u32 %v2284, 4294901760
    %2795 = vmatpush1.msra.mxu0 %v2794
    %2796 = vmatprep.subr.mxu0 0.0
    %v2797 = vand.u32 %v2283, 4294901760
    %2798 = vmatpush1.msra.mxu0 %v2797
    %2799 = vmatprep.subr.mxu0 0.0
    %2800 = vmatpush2.msra.mxu0 0.0
    %2801 = vmatprep.subr.mxu0 0.0
    %2802 = vmatpush2.msra.mxu0 0.0
    %2803 = vmatprep.subr.mxu0 0.0
    %2804 = vmatpush2.msra.mxu0 0.0
    %2805 = vmatprep.subr.mxu0 0.0
    %2806 = vmatpush2.msra.mxu0 0.0
    %2807 = vmatprep.subr.mxu0 0.0
    %2808 = vmatpush2.msra.mxu0 0.0
    %2809 = vmatprep.subr.mxu0 0.0
    %2810 = vmatpush2.msra.mxu0 0.0
    %2811 = vmatprep.subr.mxu0 0.0
    %2812 = vmatpush2.msra.mxu0 0.0
    %2813 = vmatprep.subr.mxu0 0.0
    %2814 = vmatpush2.msra.mxu0 0.0
    %2815 = vmatprep.subr.mxu0 0.0
    %2816 = vmatpush2.msra.mxu0 0.0
    %2817 = vmatprep.subr.mxu0 0.0
    %2818 = vmatpush2.msra.mxu0 0.0
    %2819 = vmatprep.subr.mxu0 0.0
    %2820 = vmatpush2.msra.mxu0 0.0
    %2821 = vmatprep.subr.mxu0 0.0
    %2822 = vmatpush2.msra.mxu0 0.0
    %2823 = vmatprep.subr.mxu0 0.0
    %2824 = vmatpush2.msra.mxu0 0.0
    %2825 = vmatprep.subr.mxu0 0.0
    %2826 = vmatpush2.msra.mxu0 0.0
    %2827 = vmatprep.subr.mxu0 0.0
    %2828 = vmatpush2.msra.mxu0 0.0
    %2829 = vmatprep.subr.mxu0 0.0
    %2830 = vmatpush2.msra.mxu0 0.0
    %2831 = vmatprep.mubr.f32.mxu0 0.0
    %v2832 = vand.u32 %v2299, 4294901760
    %2833 = vmatmul.mubr.f32.gmra.mxu0 %v2832
    %v2834 = vpop.f32.mrf.mxu0
    %v2835 = vadd.f32 %v2756, %v2834
    %v2836 = vpop.f32.mrf.mxu0
    %2837 = vdwg.mxu0
    %vm2838 = vcmask 568320
    %2839 = vst.msk [vmem:[#allocation2] sm:$0xf] %vm2838, %v2835
    %vm2840 = vcmask 404480
    %2841 = vst.msk [vmem:[#allocation4] sm:$0xf] %vm2840, %v1175
    %2842 = vst.msk [vmem:[#allocation6] sm:$0xf] %vm2840, %v1727
    // Predicated region
    $region50: #{tpu_custom_call.1} parent=1 // pred_check
      _
    $region51: #{tpu_custom_call.1} parent=1 // pred_check_branch
      %2844 = sbr.rel (0) target = $region53
    $region52: #{tpu_custom_call.1} parent=1 // pred_region
      %s2846 = ssub.s32 64, 64
      %2847 = vsyncadd [#allocation3], %s2846
      %s2849 = sshll.u32 [#allocation2], 4
      %s2850 = int_to_ptr.vmem [resolvable:$true] %s2849
      %2852 = dma.vmem_to_hbm [thread:$0]  %s2850, 64, %s12, [#allocation3]
    $region53: #{tpu_custom_call.1} parent=1 // pred_fallthru
      _
    // Predicated region
    $region54: #{tpu_custom_call.1} parent=1 // pred_check
      _
    $region55: #{tpu_custom_call.1} parent=1 // pred_check_branch
      %2854 = sbr.rel (0) target = $region57
    $region56: #{tpu_custom_call.1} parent=1 // pred_region
      %s2856 = ssub.s32 64, 64
      %2857 = vsyncadd [#allocation5], %s2856
      %s2859 = sshll.u32 [#allocation4], 4
      %s2860 = int_to_ptr.vmem [resolvable:$true] %s2859
      %2862 = dma.vmem_to_hbm [thread:$0]  %s2860, 64, %s13, [#allocation5]
    $region57: #{tpu_custom_call.1} parent=1 // pred_fallthru
      _
    // Predicated region
    $region58: #{tpu_custom_call.1} parent=1 // pred_check
      _
    $region59: #{tpu_custom_call.1} parent=1 // pred_check_branch
      %2864 = sbr.rel (0) target = $region61
    $region60: #{tpu_custom_call.1} parent=1 // pred_region
      %s2866 = ssub.s32 64, 64
      %2867 = vsyncadd [#allocation5], %s2866
      %s2869 = sshll.u32 [#allocation6], 4
      %s2870 = int_to_ptr.vmem [resolvable:$true] %s2869
      %2872 = dma.vmem_to_hbm [thread:$0]  %s2870, 64, %s14, [#allocation5]
    $region61: #{tpu_custom_call.1} parent=1 // pred_fallthru
      _
    // Predicated region
    $region62: #{tpu_custom_call.1} parent=1 // pred_check
      _
    $region63: #{tpu_custom_call.1} parent=1 // pred_check_branch
      %2874 = sbr.rel (0) target = $region65
    $region64: #{tpu_custom_call.1} parent=1 // pred_region
      %2875 = dma.done [#allocation3], 64
    $region65: #{tpu_custom_call.1} parent=1 // pred_fallthru
      _
    // Predicated region
    $region66: #{tpu_custom_call.1} parent=1 // pred_check
      _
    $region67: #{tpu_custom_call.1} parent=1 // pred_check_branch
      %2877 = sbr.rel (0) target = $region69
    $region68: #{tpu_custom_call.1} parent=1 // pred_region
      %2878 = dma.done [#allocation5], 64
    $region69: #{tpu_custom_call.1} parent=1 // pred_fallthru
      _
    // Predicated region
    $region70: #{tpu_custom_call.1} parent=1 // pred_check
      _
    $region71: #{tpu_custom_call.1} parent=1 // pred_check_branch
      %2880 = sbr.rel (0) target = $region73
    $region72: #{tpu_custom_call.1} parent=1 // pred_region
      %2881 = dma.done [#allocation5], 64
    $region73: #{tpu_custom_call.1} parent=1 // pred_fallthru
      _
    %2882 = vsyncpa [#allocation3], 1
    %2883 = vsyncpa [#allocation5], 1

</llo_original>
